<compile_context>
chip_gen: v5e
topology: v5e:2x2
jax: 0.10.0
libtpu: 0.0.40
codegen_flags: <defaults>
</compile_context>

<pallas_src>
import functools
import math

import jax
import jax.numpy as jnp
from jax import lax
from jax.experimental import pallas as pl
from jax.experimental.pallas import tpu as pltpu

NEG_INF = -1e4  # additive-mask convention (matches torch usage in the module)


def _transformer_layer_kernel(
    Lp, D, H,
    x0_ref, mask_ref,
    ln1g_ref, ln1b_ref, wqkv_ref, bqkv_ref, wo_ref, bo_ref,
    ln2g_ref, ln2b_ref, w1_ref, b1_ref, w2_ref, b2_ref,
    out_ref, attn_sc,
):
    layer = pl.program_id(1)
    Dh = D // H
    scale = 1.0 / math.sqrt(Dh)

    # First layer of this batch tile: load the input tokens into the resident
    # output block (constant block index across the layer axis => stays in VMEM).
    @pl.when(layer == 0)
    def _():
        out_ref[...] = x0_ref[...]

    def layer_norm(v, g, b):
        mu = jnp.mean(v, axis=-1, keepdims=True)
        var = jnp.mean((v - mu) ** 2, axis=-1, keepdims=True)
        return (v - mu) * lax.rsqrt(var + 1e-5) * g + b

    x = out_ref[...]                                    # (Lp, D) f32, resident

    # ---------------- attention branch ----------------
    xn = layer_norm(x, ln1g_ref[0], ln1b_ref[0])
    qkv = jnp.dot(xn.astype(jnp.bfloat16), wqkv_ref[0],
                  preferred_element_type=jnp.float32) + bqkv_ref[0]
    q = (qkv[:, 0 * D:1 * D] * scale).astype(jnp.bfloat16)   # scale hoisted
    k = qkv[:, 1 * D:2 * D].astype(jnp.bfloat16)
    v = qkv[:, 2 * D:3 * D].astype(jnp.bfloat16)
    m = mask_ref[0]                                     # (Lp, Lp) additive mask

    for h in range(H):                                  # H small & static
        sl = slice(h * Dh, (h + 1) * Dh)
        # scores = q_h @ k_h^T (contract feature dim, bf16 in / f32 acc)
        s = lax.dot_general(q[:, sl], k[:, sl], (((1,), (1,)), ((), ())),
                            preferred_element_type=jnp.float32)
        s = s + m
        s = s - jnp.max(s, axis=-1, keepdims=True)
        p = jnp.exp(s)
        inv = pl.reciprocal(jnp.sum(p, axis=-1, keepdims=True), approx=True)
        p = (p * inv).astype(jnp.bfloat16)
        # write head output straight into the VMEM scratch slab (no concat)
        attn_sc[:, sl] = jnp.dot(p, v[:, sl],
                                 preferred_element_type=jnp.float32)

    attn = jnp.dot(attn_sc[...].astype(jnp.bfloat16), wo_ref[0],
                   preferred_element_type=jnp.float32) + bo_ref[0]
    x = x + attn

    # ---------------- MLP branch ----------------
    xn2 = layer_norm(x, ln2g_ref[0], ln2b_ref[0])
    h1 = jnp.dot(xn2.astype(jnp.bfloat16), w1_ref[0],
                 preferred_element_type=jnp.float32) + b1_ref[0]
    h1 = h1 * jax.nn.sigmoid(1.702 * h1)                # QuickGELU, f32
    h2 = jnp.dot(h1.astype(jnp.bfloat16), w2_ref[0],
                 preferred_element_type=jnp.float32) + b2_ref[0]
    x = x + h2

    out_ref[...] = x


def transformer_forward(x, attn_mask, params, *, heads):
    """x: (L, B, D) f32, attn_mask: (B, L, L) additive f32 mask."""
    L, B, D = x.shape
    assert D % heads == 0, "d_model must be divisible by n_head"
    num_layers = params["ln1_g"].shape[0]

    # Pad seq length: 128 lane-aligned for realistic L, 8 (sublane) for tiny L.
    align = 128 if L > 32 else 8
    Lp = ((L + align - 1) // align) * align

    xb = jnp.transpose(x, (1, 0, 2)).astype(jnp.float32)          # (B, L, D)
    xb = jnp.pad(xb, ((0, 0), (0, Lp - L), (0, 0)))
    x_tokens = xb.reshape(B * Lp, D)

    mask = jnp.zeros((B, Lp, Lp), jnp.float32)
    if Lp > L:
        mask = mask.at[:, :, L:].set(NEG_INF)                     # mask padded keys
    mask = mask.at[:, :L, :L].set(attn_mask.astype(jnp.float32))

    kernel = functools.partial(_transformer_layer_kernel, Lp, D, heads)

    def per_layer(shape):
        # weights stacked as (layers, *shape); last two block dims == full dims
        return pl.BlockSpec((1,) + shape, lambda b, l: (l,) + (0,) * len(shape))

    in_specs = [
        pl.BlockSpec((Lp, D), lambda b, l: (b, 0)),               # x0 (per batch)
        pl.BlockSpec((1, Lp, Lp), lambda b, l: (b, 0, 0)),        # mask (per batch)
        per_layer((1, D)),        # ln1_g
        per_layer((1, D)),        # ln1_b
        per_layer((D, 3 * D)),    # w_qkv  (bf16)
        per_layer((1, 3 * D)),    # b_qkv
        per_layer((D, D)),        # w_o    (bf16)
        per_layer((1, D)),        # b_o
        per_layer((1, D)),        # ln2_g
        per_layer((1, D)),        # ln2_b
        per_layer((D, 4 * D)),    # w1     (bf16)
        per_layer((1, 4 * D)),    # b1
        per_layer((4 * D, D)),    # w2     (bf16)
        per_layer((1, D)),        # b2
    ]

    # Explicit VMEM budget: double-buffered bf16 weights + activations + slack.
    weight_bytes = 2 * (12 * D * D) * 2                 # 2 bufs * 12 D^2 elems * bf16
    act_bytes = 64 * Lp * D + 16 * Lp * Lp
    vmem_limit = int(max(16 << 20, min(64 << 20,
                                       weight_bytes + act_bytes + (8 << 20))))

    wq = params["w_qkv"].astype(jnp.bfloat16)
    wo = params["w_o"].astype(jnp.bfloat16)
    w1 = params["w1"].astype(jnp.bfloat16)
    w2 = params["w2"].astype(jnp.bfloat16)

    out = pl.pallas_call(
        kernel,
        out_shape=jax.ShapeDtypeStruct((B * Lp, D), jnp.float32),
        grid_spec=pltpu.PrefetchScalarGridSpec(
            num_scalar_prefetch=0,
            grid=(B, num_layers),          # batch parallel (v7x megacore), layers carried
            in_specs=in_specs,
            out_specs=pl.BlockSpec((Lp, D), lambda b, l: (b, 0)),
            scratch_shapes=[pltpu.VMEM((Lp, D), jnp.float32)],    # attn head slab
        ),
        compiler_params=pltpu.CompilerParams(
            dimension_semantics=("parallel", "arbitrary"),
            vmem_limit_bytes=vmem_limit),
    )(x_tokens, mask,
      params["ln1_g"], params["ln1_b"], wq, params["b_qkv"],
      wo, params["b_o"], params["ln2_g"], params["ln2_b"],
      w1, params["b1"], w2, params["b2"])

    out = out.reshape(B, Lp, D)[:, :L, :]
    return out.transpose(1, 0, 2)                       # back to (L, B, D)


def init_params(key, width, layers):
    D = width
    k1, k2, k3, k4 = jax.random.split(key, 4)

    def nrm(k, shape, scale=0.02):
        return jax.random.normal(k, shape, jnp.float32) * scale

    return {
        "ln1_g": jnp.ones((layers, 1, D), jnp.float32),
        "ln1_b": jnp.zeros((layers, 1, D), jnp.float32),
        "ln2_g": jnp.ones((layers, 1, D), jnp.float32),
        "ln2_b": jnp.zeros((layers, 1, D), jnp.float32),
        # matmul weights stored bf16 (MXU-native, half the HBM/VMEM footprint)
        "w_qkv": nrm(k1, (layers, D, 3 * D)).astype(jnp.bfloat16),
        "b_qkv": jnp.zeros((layers, 1, 3 * D), jnp.float32),
        "w_o":   nrm(k2, (layers, D, D)).astype(jnp.bfloat16),
        "b_o":   jnp.zeros((layers, 1, D), jnp.float32),
        "w1":    nrm(k3, (layers, D, 4 * D)).astype(jnp.bfloat16),
        "b1":    jnp.zeros((layers, 1, 4 * D), jnp.float32),
        "w2":    nrm(k4, (layers, 4 * D, D)).astype(jnp.bfloat16),
        "b2":    jnp.zeros((layers, 1, D), jnp.float32),
    }


def transformer_ref(x, mask, params, heads):
    """Pure-JAX f32 reference mirroring torch semantics (for verification)."""
    L, B, D = x.shape
    H, Dh = heads, D // heads
    xb = jnp.transpose(x, (1, 0, 2)).astype(jnp.float32)
    n_layers = params["ln1_g"].shape[0]

    def ln(v, g, b):
        mu = v.mean(-1, keepdims=True)
        var = ((v - mu) ** 2).mean(-1, keepdims=True)
        return (v - mu) / jnp.sqrt(var + 1e-5) * g + b

    for l in range(n_layers):
        xn = ln(xb, params["ln1_g"][l, 0], params["ln1_b"][l, 0])
        qkv = xn @ params["w_qkv"][l].astype(jnp.float32) + params["b_qkv"][l, 0]
        q, k, v = jnp.split(qkv, 3, axis=-1)
        q = q.reshape(B, L, H, Dh).transpose(0, 2, 1, 3) / math.sqrt(Dh)
        k = k.reshape(B, L, H, Dh).transpose(0, 2, 1, 3)
        v = v.reshape(B, L, H, Dh).transpose(0, 2, 1, 3)
        s = jnp.einsum("bhqd,bhkd->bhqk", q, k) + mask[:, None, :, :]
        p = jax.nn.softmax(s, axis=-1)
        o = jnp.einsum("bhqk,bhkd->bhqd", p, v).transpose(0, 2, 1, 3).reshape(B, L, D)
        o = o @ params["w_o"][l].astype(jnp.float32) + params["b_o"][l, 0]
        xb = xb + o
        xn2 = ln(xb, params["ln2_g"][l, 0], params["ln2_b"][l, 0])
        h = xn2 @ params["w1"][l].astype(jnp.float32) + params["b1"][l, 0]
        h = h * jax.nn.sigmoid(1.702 * h)
        h = h @ params["w2"][l].astype(jnp.float32) + params["b2"][l, 0]
        xb = xb + h
    return xb.transpose(1, 0, 2)


if __name__ == "__main__":
    L, B, D, H, N_LAYERS = 8, 2, 32, 4, 2
    key = jax.random.PRNGKey(0)
    kx, kp = jax.random.split(key)

    x = jax.random.normal(kx, (L, B, D), jnp.float32)
    causal = jnp.where(jnp.arange(L)[:, None] >= jnp.arange(L)[None, :], 0.0, NEG_INF)
    attn_mask = jnp.broadcast_to(causal, (B, L, L)).astype(jnp.float32)

    params = init_params(kp, D, N_LAYERS)

    out = transformer_forward(x, attn_mask, params, heads=H)
    out = jax.block_until_ready(out)

    ref = transformer_ref(x, attn_mask, params, H)
    assert out.shape == (L, B, D)
    err = float(jnp.max(jnp.abs(out - ref)))
    # bf16 MXU inputs + approx reciprocal => compare at mixed-precision tolerance
    assert jnp.allclose(out, ref, atol=1e-2, rtol=1e-2), err

    print("KERNEL_OK")
</pallas_src>

<mosaic_0001>
module attributes {stable_mosaic.version = 11 : i64} {
  func.func @_transformer_layer_kernel(%arg0: i32, %arg1: i32, %arg2: memref<8x32xf32, #tpu.memory_space<vmem>>, %arg3: memref<1x8x8xf32, #tpu.memory_space<vmem>>, %arg4: memref<1x1x32xf32, #tpu.memory_space<vmem>>, %arg5: memref<1x1x32xf32, #tpu.memory_space<vmem>>, %arg6: memref<1x32x96xbf16, #tpu.memory_space<vmem>>, %arg7: memref<1x1x96xf32, #tpu.memory_space<vmem>>, %arg8: memref<1x32x32xbf16, #tpu.memory_space<vmem>>, %arg9: memref<1x1x32xf32, #tpu.memory_space<vmem>>, %arg10: memref<1x1x32xf32, #tpu.memory_space<vmem>>, %arg11: memref<1x1x32xf32, #tpu.memory_space<vmem>>, %arg12: memref<1x32x128xbf16, #tpu.memory_space<vmem>>, %arg13: memref<1x1x128xf32, #tpu.memory_space<vmem>>, %arg14: memref<1x128x32xbf16, #tpu.memory_space<vmem>>, %arg15: memref<1x1x32xf32, #tpu.memory_space<vmem>>, %arg16: memref<8x32xf32, #tpu.memory_space<vmem>>, %arg17: memref<8x32xf32, #tpu.memory_space<vmem>>) attributes {dimension_semantics = [#tpu.dimension_semantics<parallel>, #tpu.dimension_semantics<arbitrary>], iteration_bounds = array<i64: 2, 2>, scalar_prefetch = 0 : i64, scratch_operands = 1 : i64, tpu.core_type = #tpu.core_type<tc>, window_params = [{transform_indices = @transform_0, window_bounds = array<i64: 8, 32>}, {transform_indices = @transform_1, window_bounds = array<i64: 1, 8, 8>}, {transform_indices = @transform_2, window_bounds = array<i64: 1, 1, 32>}, {transform_indices = @transform_3, window_bounds = array<i64: 1, 1, 32>}, {transform_indices = @transform_4, window_bounds = array<i64: 1, 32, 96>}, {transform_indices = @transform_5, window_bounds = array<i64: 1, 1, 96>}, {transform_indices = @transform_6, window_bounds = array<i64: 1, 32, 32>}, {transform_indices = @transform_7, window_bounds = array<i64: 1, 1, 32>}, {transform_indices = @transform_8, window_bounds = array<i64: 1, 1, 32>}, {transform_indices = @transform_9, window_bounds = array<i64: 1, 1, 32>}, {transform_indices = @transform_10, window_bounds = array<i64: 1, 32, 128>}, {transform_indices = @transform_11, window_bounds = array<i64: 1, 1, 128>}, {transform_indices = @transform_12, window_bounds = array<i64: 1, 128, 32>}, {transform_indices = @transform_13, window_bounds = array<i64: 1, 1, 32>}, {transform_indices = @transform_14, window_bounds = array<i64: 8, 32>}]} {
    %c0_i32 = arith.constant 0 : i32
    %0 = arith.cmpi eq, %arg1, %c0_i32 : i32
    %1 = arith.extui %0 : i1 to i32
    %c0_i32_0 = arith.constant 0 : i32
    %2 = arith.cmpi ne, %1, %c0_i32_0 : i32
    scf.if %2 {
      %c0_82 = arith.constant 0 : index
      %c0_83 = arith.constant 0 : index
      %182 = vector.load %arg2[%c0_82, %c0_83] : memref<8x32xf32, #tpu.memory_space<vmem>>, vector<8x32xf32>
      %c0_84 = arith.constant 0 : index
      %c0_85 = arith.constant 0 : index
      %183 = vector.load %arg16[%c0_84, %c0_85] : memref<8x32xf32, #tpu.memory_space<vmem>>, vector<8x32xf32>
      tpu.vector_store %arg16[%c0_84, %c0_85], %182 {strides = array<i32>} : memref<8x32xf32, #tpu.memory_space<vmem>>, vector<8x32xf32>,
    } else {
    }
    %c0 = arith.constant 0 : index
    %c0_1 = arith.constant 0 : index
    %3 = vector.load %arg16[%c0, %c0_1] : memref<8x32xf32, #tpu.memory_space<vmem>>, vector<8x32xf32>
    %c0_2 = arith.constant 0 : index
    %c0_3 = arith.constant 0 : index
    %c0_4 = arith.constant 0 : index
    %4 = vector.load %arg4[%c0_2, %c0_3, %c0_4] : memref<1x1x32xf32, #tpu.memory_space<vmem>>, vector<1x1x32xf32>
    %5 = vector.shape_cast %4 : vector<1x1x32xf32> to vector<1x32xf32>
    %c0_5 = arith.constant 0 : index
    %c0_6 = arith.constant 0 : index
    %c0_7 = arith.constant 0 : index
    %6 = vector.load %arg5[%c0_5, %c0_6, %c0_7] : memref<1x1x32xf32, #tpu.memory_space<vmem>>, vector<1x1x32xf32>
    %7 = vector.shape_cast %6 : vector<1x1x32xf32> to vector<1x32xf32>
    %cst = arith.constant dense<0.000000e+00> : vector<8xf32>
    %8 = vector.multi_reduction <add>, %3, %cst [1] : vector<8x32xf32> to vector<8xf32>
    %9 = vector.shape_cast %8 : vector<8xf32> to vector<8x1xf32>
    %cst_8 = arith.constant 3.200000e+01 : f32
    %10 = vector.broadcast %cst_8 : f32 to vector<8x1xf32>
    %11 = arith.divf %9, %10 : vector<8x1xf32>
    %12 = vector.broadcast %11 : vector<8x1xf32> to vector<8x32xf32>
    %13 = arith.subf %3, %12 : vector<8x32xf32>
    %14 = arith.mulf %13, %13 : vector<8x32xf32>
    %cst_9 = arith.constant dense<0.000000e+00> : vector<8xf32>
    %15 = vector.multi_reduction <add>, %14, %cst_9 [1] : vector<8x32xf32> to vector<8xf32>
    %16 = vector.shape_cast %15 : vector<8xf32> to vector<8x1xf32>
    %cst_10 = arith.constant 3.200000e+01 : f32
    %17 = vector.broadcast %cst_10 : f32 to vector<8x1xf32>
    %18 = arith.divf %16, %17 : vector<8x1xf32>
    %19 = vector.broadcast %11 : vector<8x1xf32> to vector<8x32xf32>
    %20 = arith.subf %3, %19 : vector<8x32xf32>
    %cst_11 = arith.constant 9.99999974E-6 : f32
    %21 = vector.broadcast %cst_11 : f32 to vector<8x1xf32>
    %22 = arith.addf %18, %21 : vector<8x1xf32>
    %23 = math.rsqrt %22 : vector<8x1xf32>
    %24 = vector.broadcast %23 : vector<8x1xf32> to vector<8x32xf32>
    %25 = arith.mulf %20, %24 : vector<8x32xf32>
    %26 = vector.broadcast %5 : vector<1x32xf32> to vector<8x32xf32>
    %27 = arith.mulf %25, %26 : vector<8x32xf32>
    %28 = vector.broadcast %7 : vector<1x32xf32> to vector<8x32xf32>
    %29 = arith.addf %27, %28 : vector<8x32xf32>
    %30 = arith.truncf %29 : vector<8x32xf32> to vector<8x32xbf16>
    %c0_12 = arith.constant 0 : index
    %c0_13 = arith.constant 0 : index
    %c0_14 = arith.constant 0 : index
    %31 = vector.load %arg6[%c0_12, %c0_13, %c0_14] : memref<1x32x96xbf16, #tpu.memory_space<vmem>>, vector<1x32x96xbf16>
    %32 = vector.shape_cast %31 : vector<1x32x96xbf16> to vector<32x96xbf16>
    %cst_15 = arith.constant dense<0.000000e+00> : vector<8x96xf32>
    %33 = tpu.matmul %30, %32, %cst_15 {dimension_numbers = #tpu.dot_dimension_numbers<[1], [0], [0], [1], [0, 0, 1, 1], [], []>} : vector<8x32xbf16>, vector<32x96xbf16>, vector<8x96xf32> -> vector<8x96xf32>
    %c0_16 = arith.constant 0 : index
    %c0_17 = arith.constant 0 : index
    %c0_18 = arith.constant 0 : index
    %34 = vector.load %arg7[%c0_16, %c0_17, %c0_18] : memref<1x1x96xf32, #tpu.memory_space<vmem>>, vector<1x1x96xf32>
    %35 = vector.shape_cast %34 : vector<1x1x96xf32> to vector<1x96xf32>
    %36 = vector.broadcast %35 : vector<1x96xf32> to vector<8x96xf32>
    %37 = arith.addf %33, %36 : vector<8x96xf32>
    %38 = vector.extract_strided_slice %37 {offsets = [0, 0], sizes = [8, 32], strides = [1, 1]} : vector<8x96xf32> to vector<8x32xf32>
    %cst_19 = arith.constant 0.353553385 : f32
    %39 = vector.broadcast %cst_19 : f32 to vector<8x32xf32>
    %40 = arith.mulf %38, %39 : vector<8x32xf32>
    %41 = arith.truncf %40 : vector<8x32xf32> to vector<8x32xbf16>
    %42 = vector.extract_strided_slice %37 {offsets = [0, 32], sizes = [8, 32], strides = [1, 1]} : vector<8x96xf32> to vector<8x32xf32>
    %43 = arith.truncf %42 : vector<8x32xf32> to vector<8x32xbf16>
    %44 = vector.extract_strided_slice %37 {offsets = [0, 64], sizes = [8, 32], strides = [1, 1]} : vector<8x96xf32> to vector<8x32xf32>
    %45 = arith.truncf %44 : vector<8x32xf32> to vector<8x32xbf16>
    %c0_20 = arith.constant 0 : index
    %c0_21 = arith.constant 0 : index
    %c0_22 = arith.constant 0 : index
    %46 = vector.load %arg3[%c0_20, %c0_21, %c0_22] : memref<1x8x8xf32, #tpu.memory_space<vmem>>, vector<1x8x8xf32>
    %47 = vector.shape_cast %46 : vector<1x8x8xf32> to vector<8x8xf32>
    %48 = vector.extract_strided_slice %41 {offsets = [0, 0], sizes = [8, 8], strides = [1, 1]} : vector<8x32xbf16> to vector<8x8xbf16>
    %49 = vector.extract_strided_slice %43 {offsets = [0, 0], sizes = [8, 8], strides = [1, 1]} : vector<8x32xbf16> to vector<8x8xbf16>
    %cst_23 = arith.constant dense<0.000000e+00> : vector<8x8xf32>
    %50 = tpu.matmul %48, %49, %cst_23 {dimension_numbers = #tpu.dot_dimension_numbers<[1], [1], [0], [0], [0, 0, 1, 0], [], []>} : vector<8x8xbf16>, vector<8x8xbf16>, vector<8x8xf32> -> vector<8x8xf32>
    %51 = arith.addf %50, %47 : vector<8x8xf32>
    %cst_24 = arith.constant dense<0xFF800000> : vector<8xf32>
    %52 = vector.multi_reduction <maximumf>, %51, %cst_24 [1] : vector<8x8xf32> to vector<8xf32>
    %53 = vector.shape_cast %52 : vector<8xf32> to vector<8x1xf32>
    %54 = vector.broadcast %53 : vector<8x1xf32> to vector<8x8xf32>
    %55 = arith.subf %51, %54 : vector<8x8xf32>
    %56 = math.exp %55 : vector<8x8xf32>
    %cst_25 = arith.constant dense<0.000000e+00> : vector<8xf32>
    %57 = vector.multi_reduction <add>, %56, %cst_25 [1] : vector<8x8xf32> to vector<8xf32>
    %58 = vector.shape_cast %57 : vector<8xf32> to vector<8x1xf32>
    %59 = tpu.reciprocal %58 {approx = true} : vector<8x1xf32> -> vector<8x1xf32>
    %60 = vector.broadcast %59 : vector<8x1xf32> to vector<8x8xf32>
    %61 = arith.mulf %56, %60 : vector<8x8xf32>
    %62 = arith.truncf %61 : vector<8x8xf32> to vector<8x8xbf16>
    %63 = vector.extract_strided_slice %45 {offsets = [0, 0], sizes = [8, 8], strides = [1, 1]} : vector<8x32xbf16> to vector<8x8xbf16>
    %cst_26 = arith.constant dense<0.000000e+00> : vector<8x8xf32>
    %64 = tpu.matmul %62, %63, %cst_26 {dimension_numbers = #tpu.dot_dimension_numbers<[1], [0], [0], [1], [0, 0, 1, 1], [], []>} : vector<8x8xbf16>, vector<8x8xbf16>, vector<8x8xf32> -> vector<8x8xf32>
    %c0_27 = arith.constant 0 : index
    %c0_28 = arith.constant 0 : index
    %65 = vector.load %arg17[%c0_27, %c0_28] : memref<8x32xf32, #tpu.memory_space<vmem>>, vector<8x8xf32>
    tpu.vector_store %arg17[%c0_27, %c0_28], %64 {strides = array<i32>} : memref<8x32xf32, #tpu.memory_space<vmem>>, vector<8x8xf32>,
    %66 = vector.extract_strided_slice %41 {offsets = [0, 8], sizes = [8, 8], strides = [1, 1]} : vector<8x32xbf16> to vector<8x8xbf16>
    %67 = vector.extract_strided_slice %43 {offsets = [0, 8], sizes = [8, 8], strides = [1, 1]} : vector<8x32xbf16> to vector<8x8xbf16>
    %cst_29 = arith.constant dense<0.000000e+00> : vector<8x8xf32>
    %68 = tpu.matmul %66, %67, %cst_29 {dimension_numbers = #tpu.dot_dimension_numbers<[1], [1], [0], [0], [0, 0, 1, 0], [], []>} : vector<8x8xbf16>, vector<8x8xbf16>, vector<8x8xf32> -> vector<8x8xf32>
    %69 = arith.addf %68, %47 : vector<8x8xf32>
    %cst_30 = arith.constant dense<0xFF800000> : vector<8xf32>
    %70 = vector.multi_reduction <maximumf>, %69, %cst_30 [1] : vector<8x8xf32> to vector<8xf32>
    %71 = vector.shape_cast %70 : vector<8xf32> to vector<8x1xf32>
    %72 = vector.broadcast %71 : vector<8x1xf32> to vector<8x8xf32>
    %73 = arith.subf %69, %72 : vector<8x8xf32>
    %74 = math.exp %73 : vector<8x8xf32>
    %cst_31 = arith.constant dense<0.000000e+00> : vector<8xf32>
    %75 = vector.multi_reduction <add>, %74, %cst_31 [1] : vector<8x8xf32> to vector<8xf32>
    %76 = vector.shape_cast %75 : vector<8xf32> to vector<8x1xf32>
    %77 = tpu.reciprocal %76 {approx = true} : vector<8x1xf32> -> vector<8x1xf32>
    %78 = vector.broadcast %77 : vector<8x1xf32> to vector<8x8xf32>
    %79 = arith.mulf %74, %78 : vector<8x8xf32>
    %80 = arith.truncf %79 : vector<8x8xf32> to vector<8x8xbf16>
    %81 = vector.extract_strided_slice %45 {offsets = [0, 8], sizes = [8, 8], strides = [1, 1]} : vector<8x32xbf16> to vector<8x8xbf16>
    %cst_32 = arith.constant dense<0.000000e+00> : vector<8x8xf32>
    %82 = tpu.matmul %80, %81, %cst_32 {dimension_numbers = #tpu.dot_dimension_numbers<[1], [0], [0], [1], [0, 0, 1, 1], [], []>} : vector<8x8xbf16>, vector<8x8xbf16>, vector<8x8xf32> -> vector<8x8xf32>
    %c0_33 = arith.constant 0 : index
    %c8 = arith.constant 8 : index
    %83 = vector.load %arg17[%c0_33, %c8] : memref<8x32xf32, #tpu.memory_space<vmem>>, vector<8x8xf32>
    tpu.vector_store %arg17[%c0_33, %c8], %82 {strides = array<i32>} : memref<8x32xf32, #tpu.memory_space<vmem>>, vector<8x8xf32>,
    %84 = vector.extract_strided_slice %41 {offsets = [0, 16], sizes = [8, 8], strides = [1, 1]} : vector<8x32xbf16> to vector<8x8xbf16>
    %85 = vector.extract_strided_slice %43 {offsets = [0, 16], sizes = [8, 8], strides = [1, 1]} : vector<8x32xbf16> to vector<8x8xbf16>
    %cst_34 = arith.constant dense<0.000000e+00> : vector<8x8xf32>
    %86 = tpu.matmul %84, %85, %cst_34 {dimension_numbers = #tpu.dot_dimension_numbers<[1], [1], [0], [0], [0, 0, 1, 0], [], []>} : vector<8x8xbf16>, vector<8x8xbf16>, vector<8x8xf32> -> vector<8x8xf32>
    %87 = arith.addf %86, %47 : vector<8x8xf32>
    %cst_35 = arith.constant dense<0xFF800000> : vector<8xf32>
    %88 = vector.multi_reduction <maximumf>, %87, %cst_35 [1] : vector<8x8xf32> to vector<8xf32>
    %89 = vector.shape_cast %88 : vector<8xf32> to vector<8x1xf32>
    %90 = vector.broadcast %89 : vector<8x1xf32> to vector<8x8xf32>
    %91 = arith.subf %87, %90 : vector<8x8xf32>
    %92 = math.exp %91 : vector<8x8xf32>
    %cst_36 = arith.constant dense<0.000000e+00> : vector<8xf32>
    %93 = vector.multi_reduction <add>, %92, %cst_36 [1] : vector<8x8xf32> to vector<8xf32>
    %94 = vector.shape_cast %93 : vector<8xf32> to vector<8x1xf32>
    %95 = tpu.reciprocal %94 {approx = true} : vector<8x1xf32> -> vector<8x1xf32>
    %96 = vector.broadcast %95 : vector<8x1xf32> to vector<8x8xf32>
    %97 = arith.mulf %92, %96 : vector<8x8xf32>
    %98 = arith.truncf %97 : vector<8x8xf32> to vector<8x8xbf16>
    %99 = vector.extract_strided_slice %45 {offsets = [0, 16], sizes = [8, 8], strides = [1, 1]} : vector<8x32xbf16> to vector<8x8xbf16>
    %cst_37 = arith.constant dense<0.000000e+00> : vector<8x8xf32>
    %100 = tpu.matmul %98, %99, %cst_37 {dimension_numbers = #tpu.dot_dimension_numbers<[1], [0], [0], [1], [0, 0, 1, 1], [], []>} : vector<8x8xbf16>, vector<8x8xbf16>, vector<8x8xf32> -> vector<8x8xf32>
    %c0_38 = arith.constant 0 : index
    %c16 = arith.constant 16 : index
    %101 = vector.load %arg17[%c0_38, %c16] : memref<8x32xf32, #tpu.memory_space<vmem>>, vector<8x8xf32>
    tpu.vector_store %arg17[%c0_38, %c16], %100 {strides = array<i32>} : memref<8x32xf32, #tpu.memory_space<vmem>>, vector<8x8xf32>,
    %102 = vector.extract_strided_slice %41 {offsets = [0, 24], sizes = [8, 8], strides = [1, 1]} : vector<8x32xbf16> to vector<8x8xbf16>
    %103 = vector.extract_strided_slice %43 {offsets = [0, 24], sizes = [8, 8], strides = [1, 1]} : vector<8x32xbf16> to vector<8x8xbf16>
    %cst_39 = arith.constant dense<0.000000e+00> : vector<8x8xf32>
    %104 = tpu.matmul %102, %103, %cst_39 {dimension_numbers = #tpu.dot_dimension_numbers<[1], [1], [0], [0], [0, 0, 1, 0], [], []>} : vector<8x8xbf16>, vector<8x8xbf16>, vector<8x8xf32> -> vector<8x8xf32>
    %105 = arith.addf %104, %47 : vector<8x8xf32>
    %cst_40 = arith.constant dense<0xFF800000> : vector<8xf32>
    %106 = vector.multi_reduction <maximumf>, %105, %cst_40 [1] : vector<8x8xf32> to vector<8xf32>
    %107 = vector.shape_cast %106 : vector<8xf32> to vector<8x1xf32>
    %108 = vector.broadcast %107 : vector<8x1xf32> to vector<8x8xf32>
    %109 = arith.subf %105, %108 : vector<8x8xf32>
    %110 = math.exp %109 : vector<8x8xf32>
    %cst_41 = arith.constant dense<0.000000e+00> : vector<8xf32>
    %111 = vector.multi_reduction <add>, %110, %cst_41 [1] : vector<8x8xf32> to vector<8xf32>
    %112 = vector.shape_cast %111 : vector<8xf32> to vector<8x1xf32>
    %113 = tpu.reciprocal %112 {approx = true} : vector<8x1xf32> -> vector<8x1xf32>
    %114 = vector.broadcast %113 : vector<8x1xf32> to vector<8x8xf32>
    %115 = arith.mulf %110, %114 : vector<8x8xf32>
    %116 = arith.truncf %115 : vector<8x8xf32> to vector<8x8xbf16>
    %117 = vector.extract_strided_slice %45 {offsets = [0, 24], sizes = [8, 8], strides = [1, 1]} : vector<8x32xbf16> to vector<8x8xbf16>
    %cst_42 = arith.constant dense<0.000000e+00> : vector<8x8xf32>
    %118 = tpu.matmul %116, %117, %cst_42 {dimension_numbers = #tpu.dot_dimension_numbers<[1], [0], [0], [1], [0, 0, 1, 1], [], []>} : vector<8x8xbf16>, vector<8x8xbf16>, vector<8x8xf32> -> vector<8x8xf32>
    %c0_43 = arith.constant 0 : index
    %c24 = arith.constant 24 : index
    %119 = vector.load %arg17[%c0_43, %c24] : memref<8x32xf32, #tpu.memory_space<vmem>>, vector<8x8xf32>
    tpu.vector_store %arg17[%c0_43, %c24], %118 {strides = array<i32>} : memref<8x32xf32, #tpu.memory_space<vmem>>, vector<8x8xf32>,
    %c0_44 = arith.constant 0 : index
    %c0_45 = arith.constant 0 : index
    %120 = vector.load %arg17[%c0_44, %c0_45] : memref<8x32xf32, #tpu.memory_space<vmem>>, vector<8x32xf32>
    %121 = arith.truncf %120 : vector<8x32xf32> to vector<8x32xbf16>
    %c0_46 = arith.constant 0 : index
    %c0_47 = arith.constant 0 : index
    %c0_48 = arith.constant 0 : index
    %122 = vector.load %arg8[%c0_46, %c0_47, %c0_48] : memref<1x32x32xbf16, #tpu.memory_space<vmem>>, vector<1x32x32xbf16>
    %123 = vector.shape_cast %122 : vector<1x32x32xbf16> to vector<32x32xbf16>
    %cst_49 = arith.constant dense<0.000000e+00> : vector<8x32xf32>
    %124 = tpu.matmul %121, %123, %cst_49 {dimension_numbers = #tpu.dot_dimension_numbers<[1], [0], [0], [1], [0, 0, 1, 1], [], []>} : vector<8x32xbf16>, vector<32x32xbf16>, vector<8x32xf32> -> vector<8x32xf32>
    %c0_50 = arith.constant 0 : index
    %c0_51 = arith.constant 0 : index
    %c0_52 = arith.constant 0 : index
    %125 = vector.load %arg9[%c0_50, %c0_51, %c0_52] : memref<1x1x32xf32, #tpu.memory_space<vmem>>, vector<1x1x32xf32>
    %126 = vector.shape_cast %125 : vector<1x1x32xf32> to vector<1x32xf32>
    %127 = vector.broadcast %126 : vector<1x32xf32> to vector<8x32xf32>
    %128 = arith.addf %124, %127 : vector<8x32xf32>
    %129 = arith.addf %3, %128 : vector<8x32xf32>
    %c0_53 = arith.constant 0 : index
    %c0_54 = arith.constant 0 : index
    %c0_55 = arith.constant 0 : index
    %130 = vector.load %arg10[%c0_53, %c0_54, %c0_55] : memref<1x1x32xf32, #tpu.memory_space<vmem>>, vector<1x1x32xf32>
    %131 = vector.shape_cast %130 : vector<1x1x32xf32> to vector<1x32xf32>
    %c0_56 = arith.constant 0 : index
    %c0_57 = arith.constant 0 : index
    %c0_58 = arith.constant 0 : index
    %132 = vector.load %arg11[%c0_56, %c0_57, %c0_58] : memref<1x1x32xf32, #tpu.memory_space<vmem>>, vector<1x1x32xf32>
    %133 = vector.shape_cast %132 : vector<1x1x32xf32> to vector<1x32xf32>
    %cst_59 = arith.constant dense<0.000000e+00> : vector<8xf32>
    %134 = vector.multi_reduction <add>, %129, %cst_59 [1] : vector<8x32xf32> to vector<8xf32>
    %135 = vector.shape_cast %134 : vector<8xf32> to vector<8x1xf32>
    %cst_60 = arith.constant 3.200000e+01 : f32
    %136 = vector.broadcast %cst_60 : f32 to vector<8x1xf32>
    %137 = arith.divf %135, %136 : vector<8x1xf32>
    %138 = vector.broadcast %137 : vector<8x1xf32> to vector<8x32xf32>
    %139 = arith.subf %129, %138 : vector<8x32xf32>
    %140 = arith.mulf %139, %139 : vector<8x32xf32>
    %cst_61 = arith.constant dense<0.000000e+00> : vector<8xf32>
    %141 = vector.multi_reduction <add>, %140, %cst_61 [1] : vector<8x32xf32> to vector<8xf32>
    %142 = vector.shape_cast %141 : vector<8xf32> to vector<8x1xf32>
    %cst_62 = arith.constant 3.200000e+01 : f32
    %143 = vector.broadcast %cst_62 : f32 to vector<8x1xf32>
    %144 = arith.divf %142, %143 : vector<8x1xf32>
    %145 = vector.broadcast %137 : vector<8x1xf32> to vector<8x32xf32>
    %146 = arith.subf %129, %145 : vector<8x32xf32>
    %cst_63 = arith.constant 9.99999974E-6 : f32
    %147 = vector.broadcast %cst_63 : f32 to vector<8x1xf32>
    %148 = arith.addf %144, %147 : vector<8x1xf32>
    %149 = math.rsqrt %148 : vector<8x1xf32>
    %150 = vector.broadcast %149 : vector<8x1xf32> to vector<8x32xf32>
    %151 = arith.mulf %146, %150 : vector<8x32xf32>
    %152 = vector.broadcast %131 : vector<1x32xf32> to vector<8x32xf32>
    %153 = arith.mulf %151, %152 : vector<8x32xf32>
    %154 = vector.broadcast %133 : vector<1x32xf32> to vector<8x32xf32>
    %155 = arith.addf %153, %154 : vector<8x32xf32>
    %156 = arith.truncf %155 : vector<8x32xf32> to vector<8x32xbf16>
    %c0_64 = arith.constant 0 : index
    %c0_65 = arith.constant 0 : index
    %c0_66 = arith.constant 0 : index
    %157 = vector.load %arg12[%c0_64, %c0_65, %c0_66] : memref<1x32x128xbf16, #tpu.memory_space<vmem>>, vector<1x32x128xbf16>
    %158 = vector.shape_cast %157 : vector<1x32x128xbf16> to vector<32x128xbf16>
    %cst_67 = arith.constant dense<0.000000e+00> : vector<8x128xf32>
    %159 = tpu.matmul %156, %158, %cst_67 {dimension_numbers = #tpu.dot_dimension_numbers<[1], [0], [0], [1], [0, 0, 1, 1], [], []>} : vector<8x32xbf16>, vector<32x128xbf16>, vector<8x128xf32> -> vector<8x128xf32>
    %c0_68 = arith.constant 0 : index
    %c0_69 = arith.constant 0 : index
    %c0_70 = arith.constant 0 : index
    %160 = vector.load %arg13[%c0_68, %c0_69, %c0_70] : memref<1x1x128xf32, #tpu.memory_space<vmem>>, vector<1x1x128xf32>
    %161 = vector.shape_cast %160 : vector<1x1x128xf32> to vector<1x128xf32>
    %162 = vector.broadcast %161 : vector<1x128xf32> to vector<8x128xf32>
    %163 = arith.addf %159, %162 : vector<8x128xf32>
    %cst_71 = arith.constant 1.702000e+00 : f32
    %164 = vector.broadcast %cst_71 : f32 to vector<8x128xf32>
    %165 = arith.mulf %164, %163 : vector<8x128xf32>
    %166 = arith.negf %165 : vector<8x128xf32>
    %167 = math.exp %166 : vector<8x128xf32>
    %cst_72 = arith.constant 1.000000e+00 : f32
    %168 = vector.broadcast %cst_72 : f32 to vector<8x128xf32>
    %169 = arith.addf %168, %167 : vector<8x128xf32>
    %170 = arith.divf %168, %169 : vector<8x128xf32>
    %171 = arith.mulf %163, %170 : vector<8x128xf32>
    %172 = arith.truncf %171 : vector<8x128xf32> to vector<8x128xbf16>
    %c0_73 = arith.constant 0 : index
    %c0_74 = arith.constant 0 : index
    %c0_75 = arith.constant 0 : index
    %173 = vector.load %arg14[%c0_73, %c0_74, %c0_75] : memref<1x128x32xbf16, #tpu.memory_space<vmem>>, vector<1x128x32xbf16>
    %174 = vector.shape_cast %173 : vector<1x128x32xbf16> to vector<128x32xbf16>
    %cst_76 = arith.constant dense<0.000000e+00> : vector<8x32xf32>
    %175 = tpu.matmul %172, %174, %cst_76 {dimension_numbers = #tpu.dot_dimension_numbers<[1], [0], [0], [1], [0, 0, 1, 1], [], []>} : vector<8x128xbf16>, vector<128x32xbf16>, vector<8x32xf32> -> vector<8x32xf32>
    %c0_77 = arith.constant 0 : index
    %c0_78 = arith.constant 0 : index
    %c0_79 = arith.constant 0 : index
    %176 = vector.load %arg15[%c0_77, %c0_78, %c0_79] : memref<1x1x32xf32, #tpu.memory_space<vmem>>, vector<1x1x32xf32>
    %177 = vector.shape_cast %176 : vector<1x1x32xf32> to vector<1x32xf32>
    %178 = vector.broadcast %177 : vector<1x32xf32> to vector<8x32xf32>
    %179 = arith.addf %175, %178 : vector<8x32xf32>
    %180 = arith.addf %129, %179 : vector<8x32xf32>
    %c0_80 = arith.constant 0 : index
    %c0_81 = arith.constant 0 : index
    %181 = vector.load %arg16[%c0_80, %c0_81] : memref<8x32xf32, #tpu.memory_space<vmem>>, vector<8x32xf32>
    tpu.vector_store %arg16[%c0_80, %c0_81], %180 {strides = array<i32>} : memref<8x32xf32, #tpu.memory_space<vmem>>, vector<8x32xf32>,
    return
  }
  func.func @transform_0(%arg0: i32, %arg1: i32) -> (i32, i32) {
    %c0_i32 = arith.constant 0 : i32
    %c0_i32_0 = arith.constant 0 : i32
    return %arg0, %c0_i32 : i32, i32
  }
  func.func @transform_1(%arg0: i32, %arg1: i32) -> (i32, i32, i32) {
    %c0_i32 = arith.constant 0 : i32
    %c0_i32_0 = arith.constant 0 : i32
    %c0_i32_1 = arith.constant 0 : i32
    return %arg0, %c0_i32, %c0_i32_0 : i32, i32, i32
  }
  func.func @transform_2(%arg0: i32, %arg1: i32) -> (i32, i32, i32) {
    %c0_i32 = arith.constant 0 : i32
    %c0_i32_0 = arith.constant 0 : i32
    %c0_i32_1 = arith.constant 0 : i32
    return %arg1, %c0_i32, %c0_i32_0 : i32, i32, i32
  }
  func.func @transform_3(%arg0: i32, %arg1: i32) -> (i32, i32, i32) {
    %c0_i32 = arith.constant 0 : i32
    %c0_i32_0 = arith.constant 0 : i32
    %c0_i32_1 = arith.constant 0 : i32
    return %arg1, %c0_i32, %c0_i32_0 : i32, i32, i32
  }
  func.func @transform_4(%arg0: i32, %arg1: i32) -> (i32, i32, i32) {
    %c0_i32 = arith.constant 0 : i32
    %c0_i32_0 = arith.constant 0 : i32
    %c0_i32_1 = arith.constant 0 : i32
    return %arg1, %c0_i32, %c0_i32_0 : i32, i32, i32
  }
  func.func @transform_5(%arg0: i32, %arg1: i32) -> (i32, i32, i32) {
    %c0_i32 = arith.constant 0 : i32
    %c0_i32_0 = arith.constant 0 : i32
    %c0_i32_1 = arith.constant 0 : i32
    return %arg1, %c0_i32, %c0_i32_0 : i32, i32, i32
  }
  func.func @transform_6(%arg0: i32, %arg1: i32) -> (i32, i32, i32) {
    %c0_i32 = arith.constant 0 : i32
    %c0_i32_0 = arith.constant 0 : i32
    %c0_i32_1 = arith.constant 0 : i32
    return %arg1, %c0_i32, %c0_i32_0 : i32, i32, i32
  }
  func.func @transform_7(%arg0: i32, %arg1: i32) -> (i32, i32, i32) {
    %c0_i32 = arith.constant 0 : i32
    %c0_i32_0 = arith.constant 0 : i32
    %c0_i32_1 = arith.constant 0 : i32
    return %arg1, %c0_i32, %c0_i32_0 : i32, i32, i32
  }
  func.func @transform_8(%arg0: i32, %arg1: i32) -> (i32, i32, i32) {
    %c0_i32 = arith.constant 0 : i32
    %c0_i32_0 = arith.constant 0 : i32
    %c0_i32_1 = arith.constant 0 : i32
    return %arg1, %c0_i32, %c0_i32_0 : i32, i32, i32
  }
  func.func @transform_9(%arg0: i32, %arg1: i32) -> (i32, i32, i32) {
    %c0_i32 = arith.constant 0 : i32
    %c0_i32_0 = arith.constant 0 : i32
    %c0_i32_1 = arith.constant 0 : i32
    return %arg1, %c0_i32, %c0_i32_0 : i32, i32, i32
  }
  func.func @transform_10(%arg0: i32, %arg1: i32) -> (i32, i32, i32) {
    %c0_i32 = arith.constant 0 : i32
    %c0_i32_0 = arith.constant 0 : i32
    %c0_i32_1 = arith.constant 0 : i32
    return %arg1, %c0_i32, %c0_i32_0 : i32, i32, i32
  }
  func.func @transform_11(%arg0: i32, %arg1: i32) -> (i32, i32, i32) {
    %c0_i32 = arith.constant 0 : i32
    %c0_i32_0 = arith.constant 0 : i32
    %c0_i32_1 = arith.constant 0 : i32
    return %arg1, %c0_i32, %c0_i32_0 : i32, i32, i32
  }
  func.func @transform_12(%arg0: i32, %arg1: i32) -> (i32, i32, i32) {
    %c0_i32 = arith.constant 0 : i32
    %c0_i32_0 = arith.constant 0 : i32
    %c0_i32_1 = arith.constant 0 : i32
    return %arg1, %c0_i32, %c0_i32_0 : i32, i32, i32
  }
  func.func @transform_13(%arg0: i32, %arg1: i32) -> (i32, i32, i32) {
    %c0_i32 = arith.constant 0 : i32
    %c0_i32_0 = arith.constant 0 : i32
    %c0_i32_1 = arith.constant 0 : i32
    return %arg1, %c0_i32, %c0_i32_0 : i32, i32, i32
  }
  func.func @transform_14(%arg0: i32, %arg1: i32) -> (i32, i32) {
    %c0_i32 = arith.constant 0 : i32
    %c0_i32_0 = arith.constant 0 : i32
    return %arg0, %c0_i32 : i32, i32
  }
}

</mosaic_0001>

<llo_original>
// kernel: tpu_custom_call.1
$region0: #{tpu_custom_call.1}
  #allocation0 [shape = 'u32[]', space=smem, size = 0x4, offset = 0x4, fixed_abs, tag = 'smem constant byte address 0x4 - core index']
  #allocation1 [shape = 'u32[72,128]{1,0:T(1,128)}', space=vmem, size = 0x9000, scoped, tag = 'internal scratch']
  #allocation2 [shape = 'f32[8,32]{1,0:T(8,128)}', space=vmem, size = 0x1000, scoped, tag = 'scratch operand']
  %s0 = inlined_call_operand.vmem [shape: f32[16,32], index: 0, kind: input, shape index: {}]
  %s1 = inlined_call_operand.vmem [shape: f32[2,8,8], index: 1, kind: input, shape index: {}]
  %s2 = inlined_call_operand.vmem [shape: f32[2,1,32], index: 2, kind: input, shape index: {}]
  %s3 = inlined_call_operand.vmem [shape: f32[2,1,32], index: 3, kind: input, shape index: {}]
  %s4 = inlined_call_operand.vmem [shape: bf16[2,32,96], index: 4, kind: input, shape index: {}]
  %s5 = inlined_call_operand.vmem [shape: f32[2,1,96], index: 5, kind: input, shape index: {}]
  %s6 = inlined_call_operand.vmem [shape: bf16[2,32,32], index: 6, kind: input, shape index: {}]
  %s7 = inlined_call_operand.vmem [shape: f32[2,1,32], index: 7, kind: input, shape index: {}]
  %s8 = inlined_call_operand.vmem [shape: f32[2,1,32], index: 8, kind: input, shape index: {}]
  %s9 = inlined_call_operand.vmem [shape: f32[2,1,32], index: 9, kind: input, shape index: {}]
  %s10 = inlined_call_operand.vmem [shape: bf16[2,32,128], index: 10, kind: input, shape index: {}]
  %s11 = inlined_call_operand.vmem [shape: f32[2,1,128], index: 11, kind: input, shape index: {}]
  %s12 = inlined_call_operand.vmem [shape: bf16[2,128,32], index: 12, kind: input, shape index: {}]
  %s13 = inlined_call_operand.vmem [shape: f32[2,1,32], index: 13, kind: input, shape index: {}]
  %s14 = inlined_call_operand.hbm [shape: f32[16,32], index: 14, kind: output, shape index: {}]
  %s15 = sld [smem:[#allocation0]]
  $region93: #{tpu_custom_call.1} parent=0
    _
  %s17 = ssub.s32 1, %s15
  %s18 = scalar_select 0, %s17, %s15
  $region1: #{tpu_custom_call.1} parent=0
    #allocation3 [shape = 'u8[8192]{0}', space=vmem, size = 0x2000, scoped, tag = 'output window, operand 0']
    #allocation4 [shape = 's32[2]{0}', space=sflag, size = 0x8, scoped, tag = 'scoped memory for tpu_custom_call.1']
    %19 = vsyncpa [#allocation4], 0
    %s20 = scalar_lea.sflag [#allocation4], 1
    %21 = vsyncpa %s20, 0
    loop: start=0, step=1, limit=6
    $region2: #{tpu_custom_call.1} parent=1 // loop_pre_header
      _
    $region3: #{tpu_custom_call.1} parent=1 // loop_header
      %s23 = sphi 0, %s27
      %p24 = scmp.ge.s32.totalorder %s23, 6
      %s30 = sphi 0, %s42
      %s31 = sphi 0, %s38
      %s32 = sphi 0, %s30
      %s33 = sphi 0, %s31
      %s34 = sphi 0, %s32
      %s35 = sphi 0, %s33
      %s45 = sphi 0, %s47
      %s48 = sphi 0, %s45
      %s49 = sphi 0, %s48
      %s65 = sphi 0, %s49
      %s71 = sphi 0, %s73
      %s74 = sphi 0, %s71
      %s75 = sphi 0, %s74
      %s91 = sphi 0, %s75
      %s97 = sphi 0, %s99
      %s100 = sphi 0, %s97
      %s101 = sphi 0, %s100
      %s117 = sphi 0, %s101
      %s123 = sphi 0, %s125
      %s126 = sphi 0, %s123
      %s127 = sphi 0, %s126
      %s143 = sphi 0, %s127
      %s149 = sphi 0, %s151
      %s152 = sphi 0, %s149
      %s153 = sphi 0, %s152
      %s169 = sphi 0, %s153
      %s175 = sphi 0, %s177
      %s178 = sphi 0, %s175
      %s179 = sphi 0, %s178
      %s195 = sphi 0, %s179
      %s201 = sphi 0, %s203
      %s204 = sphi 0, %s201
      %s205 = sphi 0, %s204
      %s221 = sphi 0, %s205
      %s227 = sphi 0, %s229
      %s230 = sphi 0, %s227
      %s231 = sphi 0, %s230
      %s247 = sphi 0, %s231
      %s253 = sphi 0, %s255
      %s256 = sphi 0, %s253
      %s257 = sphi 0, %s256
      %s273 = sphi 0, %s257
      %s279 = sphi 0, %s281
      %s282 = sphi 0, %s279
      %s283 = sphi 0, %s282
      %s299 = sphi 0, %s283
      %s305 = sphi 0, %s307
      %s308 = sphi 0, %s305
      %s309 = sphi 0, %s308
      %s325 = sphi 0, %s309
      %s331 = sphi 0, %s333
      %s334 = sphi 0, %s331
      %s335 = sphi 0, %s334
      %s351 = sphi 0, %s335
      %s357 = sphi 0, %s359
      %s360 = sphi 0, %s357
      %s361 = sphi 0, %s360
      %s377 = sphi 0, %s361
      %s383 = sphi 0, %s385
      %s386 = sphi 0, %s383
      %s387 = sphi 0, %s386
      %s403 = sphi 0, %s387
      %s409 = sphi 0, %s411
      %s412 = sphi 0, %s409
      %s413 = sphi 0, %s412
      %s429 = sphi 0, %s413
    $region4: #{tpu_custom_call.1} parent=1 // loop_header_branch
      %26 = sbr.rel (%p24) target = $region8
    $region5: #{tpu_custom_call.1} parent=1 // loop_body
      %s28 = ssub.s32 %s23, 1
      %s29 = ssub.s32 %s23, 2
      %s36 = sadd.s32 1, %s31
      %p37 = scmp.ge.s32.totalorder %s36, 2
      %s38 = scalar_select %p37, 0, %s36
      %s39 = sadd.s32 1, %s30
      %s40 = scalar_select %p37, %s39, %s30
      %p41 = scmp.ge.s32.totalorder %s40, 2
      %s42 = scalar_select %p41, 0, %s40
      %s43 = ssub.s32 %s30, %s42
      %p44 = scmp.eq.s32.totalorder %s43, 0
      %s46 = sadd.s32 %s45, 1
      %s47 = scalar_select %p44, %s45, %s46
      %p50 = pneg %p44
      %p51 = scmp.eq.s32.totalorder %s23, 3
      %p52 = por %p50, %p51
      %p53 = scmp.ne.s32.totalorder %s45, %s48
      %p54 = scmp.eq.s32.totalorder %s23, 0
      %p55 = por %p53, %p54
      %p56 = scmp.ne.s32.totalorder %s45, %s48
      %p57 = scmp.eq.s32.totalorder %s28, 3
      %p58 = por %p56, %p57
      %p59 = scmp.ne.s32.totalorder %s48, %s49
      %p60 = scmp.eq.s32.totalorder %s28, 0
      %p61 = por %p59, %p60
      %p62 = scmp.ne.s32.totalorder %s48, %s49
      %p63 = scmp.eq.s32.totalorder %s29, 3
      %p64 = por %p62, %p63
      %p66 = scmp.ne.s32.totalorder %s49, %s65
      %p67 = scmp.eq.s32.totalorder %s29, 0
      %p68 = por %p66, %p67
      %s69 = ssub.s32 %s30, %s42
      %p70 = scmp.eq.s32.totalorder %s69, 0
      %s72 = sadd.s32 %s71, 1
      %s73 = scalar_select %p70, %s71, %s72
      %p76 = pneg %p70
      %p77 = scmp.eq.s32.totalorder %s23, 3
      %p78 = por %p76, %p77
      %p79 = scmp.ne.s32.totalorder %s71, %s74
      %p80 = scmp.eq.s32.totalorder %s23, 0
      %p81 = por %p79, %p80
      %p82 = scmp.ne.s32.totalorder %s71, %s74
      %p83 = scmp.eq.s32.totalorder %s28, 3
      %p84 = por %p82, %p83
      %p85 = scmp.ne.s32.totalorder %s74, %s75
      %p86 = scmp.eq.s32.totalorder %s28, 0
      %p87 = por %p85, %p86
      %p88 = scmp.ne.s32.totalorder %s74, %s75
      %p89 = scmp.eq.s32.totalorder %s29, 3
      %p90 = por %p88, %p89
      %p92 = scmp.ne.s32.totalorder %s75, %s91
      %p93 = scmp.eq.s32.totalorder %s29, 0
      %p94 = por %p92, %p93
      %s95 = ssub.s32 %s31, %s38
      %p96 = scmp.eq.s32.totalorder %s95, 0
      %s98 = sadd.s32 %s97, 1
      %s99 = scalar_select %p96, %s97, %s98
      %p102 = pneg %p96
      %p103 = scmp.eq.s32.totalorder %s23, 3
      %p104 = por %p102, %p103
      %p105 = scmp.ne.s32.totalorder %s97, %s100
      %p106 = scmp.eq.s32.totalorder %s23, 0
      %p107 = por %p105, %p106
      %p108 = scmp.ne.s32.totalorder %s97, %s100
      %p109 = scmp.eq.s32.totalorder %s28, 3
      %p110 = por %p108, %p109
      %p111 = scmp.ne.s32.totalorder %s100, %s101
      %p112 = scmp.eq.s32.totalorder %s28, 0
      %p113 = por %p111, %p112
      %p114 = scmp.ne.s32.totalorder %s100, %s101
      %p115 = scmp.eq.s32.totalorder %s29, 3
      %p116 = por %p114, %p115
      %p118 = scmp.ne.s32.totalorder %s101, %s117
      %p119 = scmp.eq.s32.totalorder %s29, 0
      %p120 = por %p118, %p119
      %s121 = ssub.s32 %s31, %s38
      %p122 = scmp.eq.s32.totalorder %s121, 0
      %s124 = sadd.s32 %s123, 1
      %s125 = scalar_select %p122, %s123, %s124
      %p128 = pneg %p122
      %p129 = scmp.eq.s32.totalorder %s23, 3
      %p130 = por %p128, %p129
      %p131 = scmp.ne.s32.totalorder %s123, %s126
      %p132 = scmp.eq.s32.totalorder %s23, 0
      %p133 = por %p131, %p132
      %p134 = scmp.ne.s32.totalorder %s123, %s126
      %p135 = scmp.eq.s32.totalorder %s28, 3
      %p136 = por %p134, %p135
      %p137 = scmp.ne.s32.totalorder %s126, %s127
      %p138 = scmp.eq.s32.totalorder %s28, 0
      %p139 = por %p137, %p138
      %p140 = scmp.ne.s32.totalorder %s126, %s127
      %p141 = scmp.eq.s32.totalorder %s29, 3
      %p142 = por %p140, %p141
      %p144 = scmp.ne.s32.totalorder %s127, %s143
      %p145 = scmp.eq.s32.totalorder %s29, 0
      %p146 = por %p144, %p145
      %s147 = ssub.s32 %s31, %s38
      %p148 = scmp.eq.s32.totalorder %s147, 0
      %s150 = sadd.s32 %s149, 1
      %s151 = scalar_select %p148, %s149, %s150
      %p154 = pneg %p148
      %p155 = scmp.eq.s32.totalorder %s23, 3
      %p156 = por %p154, %p155
      %p157 = scmp.ne.s32.totalorder %s149, %s152
      %p158 = scmp.eq.s32.totalorder %s23, 0
      %p159 = por %p157, %p158
      %p160 = scmp.ne.s32.totalorder %s149, %s152
      %p161 = scmp.eq.s32.totalorder %s28, 3
      %p162 = por %p160, %p161
      %p163 = scmp.ne.s32.totalorder %s152, %s153
      %p164 = scmp.eq.s32.totalorder %s28, 0
      %p165 = por %p163, %p164
      %p166 = scmp.ne.s32.totalorder %s152, %s153
      %p167 = scmp.eq.s32.totalorder %s29, 3
      %p168 = por %p166, %p167
      %p170 = scmp.ne.s32.totalorder %s153, %s169
      %p171 = scmp.eq.s32.totalorder %s29, 0
      %p172 = por %p170, %p171
      %s173 = ssub.s32 %s31, %s38
      %p174 = scmp.eq.s32.totalorder %s173, 0
      %s176 = sadd.s32 %s175, 1
      %s177 = scalar_select %p174, %s175, %s176
      %p180 = pneg %p174
      %p181 = scmp.eq.s32.totalorder %s23, 3
      %p182 = por %p180, %p181
      %p183 = scmp.ne.s32.totalorder %s175, %s178
      %p184 = scmp.eq.s32.totalorder %s23, 0
      %p185 = por %p183, %p184
      %p186 = scmp.ne.s32.totalorder %s175, %s178
      %p187 = scmp.eq.s32.totalorder %s28, 3
      %p188 = por %p186, %p187
      %p189 = scmp.ne.s32.totalorder %s178, %s179
      %p190 = scmp.eq.s32.totalorder %s28, 0
      %p191 = por %p189, %p190
      %p192 = scmp.ne.s32.totalorder %s178, %s179
      %p193 = scmp.eq.s32.totalorder %s29, 3
      %p194 = por %p192, %p193
      %p196 = scmp.ne.s32.totalorder %s179, %s195
      %p197 = scmp.eq.s32.totalorder %s29, 0
      %p198 = por %p196, %p197
      %s199 = ssub.s32 %s31, %s38
      %p200 = scmp.eq.s32.totalorder %s199, 0
      %s202 = sadd.s32 %s201, 1
      %s203 = scalar_select %p200, %s201, %s202
      %p206 = pneg %p200
      %p207 = scmp.eq.s32.totalorder %s23, 3
      %p208 = por %p206, %p207
      %p209 = scmp.ne.s32.totalorder %s201, %s204
      %p210 = scmp.eq.s32.totalorder %s23, 0
      %p211 = por %p209, %p210
      %p212 = scmp.ne.s32.totalorder %s201, %s204
      %p213 = scmp.eq.s32.totalorder %s28, 3
      %p214 = por %p212, %p213
      %p215 = scmp.ne.s32.totalorder %s204, %s205
      %p216 = scmp.eq.s32.totalorder %s28, 0
      %p217 = por %p215, %p216
      %p218 = scmp.ne.s32.totalorder %s204, %s205
      %p219 = scmp.eq.s32.totalorder %s29, 3
      %p220 = por %p218, %p219
      %p222 = scmp.ne.s32.totalorder %s205, %s221
      %p223 = scmp.eq.s32.totalorder %s29, 0
      %p224 = por %p222, %p223
      %s225 = ssub.s32 %s31, %s38
      %p226 = scmp.eq.s32.totalorder %s225, 0
      %s228 = sadd.s32 %s227, 1
      %s229 = scalar_select %p226, %s227, %s228
      %p232 = pneg %p226
      %p233 = scmp.eq.s32.totalorder %s23, 3
      %p234 = por %p232, %p233
      %p235 = scmp.ne.s32.totalorder %s227, %s230
      %p236 = scmp.eq.s32.totalorder %s23, 0
      %p237 = por %p235, %p236
      %p238 = scmp.ne.s32.totalorder %s227, %s230
      %p239 = scmp.eq.s32.totalorder %s28, 3
      %p240 = por %p238, %p239
      %p241 = scmp.ne.s32.totalorder %s230, %s231
      %p242 = scmp.eq.s32.totalorder %s28, 0
      %p243 = por %p241, %p242
      %p244 = scmp.ne.s32.totalorder %s230, %s231
      %p245 = scmp.eq.s32.totalorder %s29, 3
      %p246 = por %p244, %p245
      %p248 = scmp.ne.s32.totalorder %s231, %s247
      %p249 = scmp.eq.s32.totalorder %s29, 0
      %p250 = por %p248, %p249
      %s251 = ssub.s32 %s31, %s38
      %p252 = scmp.eq.s32.totalorder %s251, 0
      %s254 = sadd.s32 %s253, 1
      %s255 = scalar_select %p252, %s253, %s254
      %p258 = pneg %p252
      %p259 = scmp.eq.s32.totalorder %s23, 3
      %p260 = por %p258, %p259
      %p261 = scmp.ne.s32.totalorder %s253, %s256
      %p262 = scmp.eq.s32.totalorder %s23, 0
      %p263 = por %p261, %p262
      %p264 = scmp.ne.s32.totalorder %s253, %s256
      %p265 = scmp.eq.s32.totalorder %s28, 3
      %p266 = por %p264, %p265
      %p267 = scmp.ne.s32.totalorder %s256, %s257
      %p268 = scmp.eq.s32.totalorder %s28, 0
      %p269 = por %p267, %p268
      %p270 = scmp.ne.s32.totalorder %s256, %s257
      %p271 = scmp.eq.s32.totalorder %s29, 3
      %p272 = por %p270, %p271
      %p274 = scmp.ne.s32.totalorder %s257, %s273
      %p275 = scmp.eq.s32.totalorder %s29, 0
      %p276 = por %p274, %p275
      %s277 = ssub.s32 %s31, %s38
      %p278 = scmp.eq.s32.totalorder %s277, 0
      %s280 = sadd.s32 %s279, 1
      %s281 = scalar_select %p278, %s279, %s280
      %p284 = pneg %p278
      %p285 = scmp.eq.s32.totalorder %s23, 3
      %p286 = por %p284, %p285
      %p287 = scmp.ne.s32.totalorder %s279, %s282
      %p288 = scmp.eq.s32.totalorder %s23, 0
      %p289 = por %p287, %p288
      %p290 = scmp.ne.s32.totalorder %s279, %s282
      %p291 = scmp.eq.s32.totalorder %s28, 3
      %p292 = por %p290, %p291
      %p293 = scmp.ne.s32.totalorder %s282, %s283
      %p294 = scmp.eq.s32.totalorder %s28, 0
      %p295 = por %p293, %p294
      %p296 = scmp.ne.s32.totalorder %s282, %s283
      %p297 = scmp.eq.s32.totalorder %s29, 3
      %p298 = por %p296, %p297
      %p300 = scmp.ne.s32.totalorder %s283, %s299
      %p301 = scmp.eq.s32.totalorder %s29, 0
      %p302 = por %p300, %p301
      %s303 = ssub.s32 %s31, %s38
      %p304 = scmp.eq.s32.totalorder %s303, 0
      %s306 = sadd.s32 %s305, 1
      %s307 = scalar_select %p304, %s305, %s306
      %p310 = pneg %p304
      %p311 = scmp.eq.s32.totalorder %s23, 3
      %p312 = por %p310, %p311
      %p313 = scmp.ne.s32.totalorder %s305, %s308
      %p314 = scmp.eq.s32.totalorder %s23, 0
      %p315 = por %p313, %p314
      %p316 = scmp.ne.s32.totalorder %s305, %s308
      %p317 = scmp.eq.s32.totalorder %s28, 3
      %p318 = por %p316, %p317
      %p319 = scmp.ne.s32.totalorder %s308, %s309
      %p320 = scmp.eq.s32.totalorder %s28, 0
      %p321 = por %p319, %p320
      %p322 = scmp.ne.s32.totalorder %s308, %s309
      %p323 = scmp.eq.s32.totalorder %s29, 3
      %p324 = por %p322, %p323
      %p326 = scmp.ne.s32.totalorder %s309, %s325
      %p327 = scmp.eq.s32.totalorder %s29, 0
      %p328 = por %p326, %p327
      %s329 = ssub.s32 %s31, %s38
      %p330 = scmp.eq.s32.totalorder %s329, 0
      %s332 = sadd.s32 %s331, 1
      %s333 = scalar_select %p330, %s331, %s332
      %p336 = pneg %p330
      %p337 = scmp.eq.s32.totalorder %s23, 3
      %p338 = por %p336, %p337
      %p339 = scmp.ne.s32.totalorder %s331, %s334
      %p340 = scmp.eq.s32.totalorder %s23, 0
      %p341 = por %p339, %p340
      %p342 = scmp.ne.s32.totalorder %s331, %s334
      %p343 = scmp.eq.s32.totalorder %s28, 3
      %p344 = por %p342, %p343
      %p345 = scmp.ne.s32.totalorder %s334, %s335
      %p346 = scmp.eq.s32.totalorder %s28, 0
      %p347 = por %p345, %p346
      %p348 = scmp.ne.s32.totalorder %s334, %s335
      %p349 = scmp.eq.s32.totalorder %s29, 3
      %p350 = por %p348, %p349
      %p352 = scmp.ne.s32.totalorder %s335, %s351
      %p353 = scmp.eq.s32.totalorder %s29, 0
      %p354 = por %p352, %p353
      %s355 = ssub.s32 %s31, %s38
      %p356 = scmp.eq.s32.totalorder %s355, 0
      %s358 = sadd.s32 %s357, 1
      %s359 = scalar_select %p356, %s357, %s358
      %p362 = pneg %p356
      %p363 = scmp.eq.s32.totalorder %s23, 3
      %p364 = por %p362, %p363
      %p365 = scmp.ne.s32.totalorder %s357, %s360
      %p366 = scmp.eq.s32.totalorder %s23, 0
      %p367 = por %p365, %p366
      %p368 = scmp.ne.s32.totalorder %s357, %s360
      %p369 = scmp.eq.s32.totalorder %s28, 3
      %p370 = por %p368, %p369
      %p371 = scmp.ne.s32.totalorder %s360, %s361
      %p372 = scmp.eq.s32.totalorder %s28, 0
      %p373 = por %p371, %p372
      %p374 = scmp.ne.s32.totalorder %s360, %s361
      %p375 = scmp.eq.s32.totalorder %s29, 3
      %p376 = por %p374, %p375
      %p378 = scmp.ne.s32.totalorder %s361, %s377
      %p379 = scmp.eq.s32.totalorder %s29, 0
      %p380 = por %p378, %p379
      %s381 = ssub.s32 %s31, %s38
      %p382 = scmp.eq.s32.totalorder %s381, 0
      %s384 = sadd.s32 %s383, 1
      %s385 = scalar_select %p382, %s383, %s384
      %p388 = pneg %p382
      %p389 = scmp.eq.s32.totalorder %s23, 3
      %p390 = por %p388, %p389
      %p391 = scmp.ne.s32.totalorder %s383, %s386
      %p392 = scmp.eq.s32.totalorder %s23, 0
      %p393 = por %p391, %p392
      %p394 = scmp.ne.s32.totalorder %s383, %s386
      %p395 = scmp.eq.s32.totalorder %s28, 3
      %p396 = por %p394, %p395
      %p397 = scmp.ne.s32.totalorder %s386, %s387
      %p398 = scmp.eq.s32.totalorder %s28, 0
      %p399 = por %p397, %p398
      %p400 = scmp.ne.s32.totalorder %s386, %s387
      %p401 = scmp.eq.s32.totalorder %s29, 3
      %p402 = por %p400, %p401
      %p404 = scmp.ne.s32.totalorder %s387, %s403
      %p405 = scmp.eq.s32.totalorder %s29, 0
      %p406 = por %p404, %p405
      %s407 = ssub.s32 %s30, %s42
      %p408 = scmp.eq.s32.totalorder %s407, 0
      %s410 = sadd.s32 %s409, 1
      %s411 = scalar_select %p408, %s409, %s410
      %p414 = pneg %p408
      %p415 = scmp.eq.s32.totalorder %s23, 3
      %p416 = por %p414, %p415
      %p417 = scmp.ne.s32.totalorder %s409, %s412
      %p418 = scmp.eq.s32.totalorder %s23, 0
      %p419 = por %p417, %p418
      %p420 = scmp.ne.s32.totalorder %s409, %s412
      %p421 = scmp.eq.s32.totalorder %s28, 3
      %p422 = por %p420, %p421
      %p423 = scmp.ne.s32.totalorder %s412, %s413
      %p424 = scmp.eq.s32.totalorder %s28, 0
      %p425 = por %p423, %p424
      %p426 = scmp.ne.s32.totalorder %s412, %s413
      %p427 = scmp.eq.s32.totalorder %s29, 3
      %p428 = por %p426, %p427
      %p430 = scmp.ne.s32.totalorder %s413, %s429
      %p431 = scmp.eq.s32.totalorder %s29, 0
      %p432 = por %p430, %p431
      %p433 = scmp.le.s32.totalorder 1, %s23
      %p434 = scmp.lt.s32.totalorder %s23, 5
      %p435 = pnand %p433, %p434
      %p436 = pneg %p435
      // Predicated region
      $region9: #{tpu_custom_call.1} parent=5 // pred_check
        _
      $region10: #{tpu_custom_call.1} parent=5 // pred_check_branch
        %438 = sbr.rel (%p435) target = $region12
      $region11: #{tpu_custom_call.1} parent=5 // pred_region
        %s439 = ssub.s32 %s23, 1
      $region12: #{tpu_custom_call.1} parent=5 // pred_fallthru
        _
      %p440 = scmp.lt.s32.totalorder %s23, 4
      // Predicated region
      $region13: #{tpu_custom_call.1} parent=5 // pred_check
        %p441 = pneg %p440
      $region14: #{tpu_custom_call.1} parent=5 // pred_check_branch
        %443 = sbr.rel (%p441) target = $region16
      $region15: #{tpu_custom_call.1} parent=5 // pred_region
        // Predicated region
        $region17: #{tpu_custom_call.1} parent=15 // pred_check
          %p444 = pneg %p55
        $region18: #{tpu_custom_call.1} parent=15 // pred_check_branch
          %446 = sbr.rel (%p444) target = $region20
        $region19: #{tpu_custom_call.1} parent=15 // pred_region
          %p447 = scmp.lt.s32.totalorder %s30, 1
          %s448 = scalar_select %p447, %s30, 1
          %s449 = smul.addr %s448, 8
          %s450 = scalar_lea.vmem %s0, %s449
        $region20: #{tpu_custom_call.1} parent=15 // pred_fallthru
          _
        // Predicated region
        $region21: #{tpu_custom_call.1} parent=15 // pred_check
          %p451 = pneg %p81
        $region22: #{tpu_custom_call.1} parent=15 // pred_check_branch
          %453 = sbr.rel (%p451) target = $region24
        $region23: #{tpu_custom_call.1} parent=15 // pred_region
          %p454 = scmp.lt.s32.totalorder %s30, 1
          %s455 = scalar_select %p454, %s30, 1
          %s456 = smul.addr %s455, 8
          %s457 = scalar_lea.vmem %s1, %s456
        $region24: #{tpu_custom_call.1} parent=15 // pred_fallthru
          _
        // Predicated region
        $region25: #{tpu_custom_call.1} parent=15 // pred_check
          %p458 = pneg %p107
        $region26: #{tpu_custom_call.1} parent=15 // pred_check_branch
          %460 = sbr.rel (%p458) target = $region28
        $region27: #{tpu_custom_call.1} parent=15 // pred_region
          %p461 = scmp.lt.s32.totalorder %s31, 1
          %s462 = scalar_select %p461, %s31, 1
          %s463 = scalar_lea.vmem %s2, %s462
        $region28: #{tpu_custom_call.1} parent=15 // pred_fallthru
          _
        // Predicated region
        $region29: #{tpu_custom_call.1} parent=15 // pred_check
          %p464 = pneg %p133
        $region30: #{tpu_custom_call.1} parent=15 // pred_check_branch
          %466 = sbr.rel (%p464) target = $region32
        $region31: #{tpu_custom_call.1} parent=15 // pred_region
          %p467 = scmp.lt.s32.totalorder %s31, 1
          %s468 = scalar_select %p467, %s31, 1
          %s469 = scalar_lea.vmem %s3, %s468
        $region32: #{tpu_custom_call.1} parent=15 // pred_fallthru
          _
        // Predicated region
        $region33: #{tpu_custom_call.1} parent=15 // pred_check
          %p470 = pneg %p159
        $region34: #{tpu_custom_call.1} parent=15 // pred_check_branch
          %472 = sbr.rel (%p470) target = $region36
        $region35: #{tpu_custom_call.1} parent=15 // pred_region
          %p473 = scmp.lt.s32.totalorder %s31, 1
          %s474 = scalar_select %p473, %s31, 1
          %s475 = smul.addr %s474, 4
          %s476 = smul.addr %s475, 4
          %s477 = scalar_lea.vmem %s4, %s476
        $region36: #{tpu_custom_call.1} parent=15 // pred_fallthru
          _
        // Predicated region
        $region37: #{tpu_custom_call.1} parent=15 // pred_check
          %p478 = pneg %p185
        $region38: #{tpu_custom_call.1} parent=15 // pred_check_branch
          %480 = sbr.rel (%p478) target = $region40
        $region39: #{tpu_custom_call.1} parent=15 // pred_region
          %p481 = scmp.lt.s32.totalorder %s31, 1
          %s482 = scalar_select %p481, %s31, 1
          %s483 = scalar_lea.vmem %s5, %s482
        $region40: #{tpu_custom_call.1} parent=15 // pred_fallthru
          _
        // Predicated region
        $region41: #{tpu_custom_call.1} parent=15 // pred_check
          %p484 = pneg %p211
        $region42: #{tpu_custom_call.1} parent=15 // pred_check_branch
          %486 = sbr.rel (%p484) target = $region44
        $region43: #{tpu_custom_call.1} parent=15 // pred_region
          %p487 = scmp.lt.s32.totalorder %s31, 1
          %s488 = scalar_select %p487, %s31, 1
          %s489 = smul.addr %s488, 4
          %s490 = smul.addr %s489, 4
          %s491 = scalar_lea.vmem %s6, %s490
        $region44: #{tpu_custom_call.1} parent=15 // pred_fallthru
          _
        // Predicated region
        $region45: #{tpu_custom_call.1} parent=15 // pred_check
          %p492 = pneg %p237
        $region46: #{tpu_custom_call.1} parent=15 // pred_check_branch
          %494 = sbr.rel (%p492) target = $region48
        $region47: #{tpu_custom_call.1} parent=15 // pred_region
          %p495 = scmp.lt.s32.totalorder %s31, 1
          %s496 = scalar_select %p495, %s31, 1
          %s497 = scalar_lea.vmem %s7, %s496
        $region48: #{tpu_custom_call.1} parent=15 // pred_fallthru
          _
        // Predicated region
        $region49: #{tpu_custom_call.1} parent=15 // pred_check
          %p498 = pneg %p263
        $region50: #{tpu_custom_call.1} parent=15 // pred_check_branch
          %500 = sbr.rel (%p498) target = $region52
        $region51: #{tpu_custom_call.1} parent=15 // pred_region
          %p501 = scmp.lt.s32.totalorder %s31, 1
          %s502 = scalar_select %p501, %s31, 1
          %s503 = scalar_lea.vmem %s8, %s502
        $region52: #{tpu_custom_call.1} parent=15 // pred_fallthru
          _
        // Predicated region
        $region53: #{tpu_custom_call.1} parent=15 // pred_check
          %p504 = pneg %p289
        $region54: #{tpu_custom_call.1} parent=15 // pred_check_branch
          %506 = sbr.rel (%p504) target = $region56
        $region55: #{tpu_custom_call.1} parent=15 // pred_region
          %p507 = scmp.lt.s32.totalorder %s31, 1
          %s508 = scalar_select %p507, %s31, 1
          %s509 = scalar_lea.vmem %s9, %s508
        $region56: #{tpu_custom_call.1} parent=15 // pred_fallthru
          _
        // Predicated region
        $region57: #{tpu_custom_call.1} parent=15 // pred_check
          %p510 = pneg %p315
        $region58: #{tpu_custom_call.1} parent=15 // pred_check_branch
          %512 = sbr.rel (%p510) target = $region60
        $region59: #{tpu_custom_call.1} parent=15 // pred_region
          %p513 = scmp.lt.s32.totalorder %s31, 1
          %s514 = scalar_select %p513, %s31, 1
          %s515 = smul.addr %s514, 4
          %s516 = smul.addr %s515, 4
          %s517 = scalar_lea.vmem %s10, %s516
        $region60: #{tpu_custom_call.1} parent=15 // pred_fallthru
          _
        // Predicated region
        $region61: #{tpu_custom_call.1} parent=15 // pred_check
          %p518 = pneg %p341
        $region62: #{tpu_custom_call.1} parent=15 // pred_check_branch
          %520 = sbr.rel (%p518) target = $region64
        $region63: #{tpu_custom_call.1} parent=15 // pred_region
          %p521 = scmp.lt.s32.totalorder %s31, 1
          %s522 = scalar_select %p521, %s31, 1
          %s523 = scalar_lea.vmem %s11, %s522
        $region64: #{tpu_custom_call.1} parent=15 // pred_fallthru
          _
        // Predicated region
        $region65: #{tpu_custom_call.1} parent=15 // pred_check
          %p524 = pneg %p367
        $region66: #{tpu_custom_call.1} parent=15 // pred_check_branch
          %526 = sbr.rel (%p524) target = $region68
        $region67: #{tpu_custom_call.1} parent=15 // pred_region
          %p527 = scmp.lt.s32.totalorder %s31, 1
          %s528 = scalar_select %p527, %s31, 1
          %s529 = smul.addr %s528, 16
          %s530 = smul.addr %s529, 4
          %s531 = scalar_lea.vmem %s12, %s530
        $region68: #{tpu_custom_call.1} parent=15 // pred_fallthru
          _
        // Predicated region
        $region69: #{tpu_custom_call.1} parent=15 // pred_check
          %p532 = pneg %p393
        $region70: #{tpu_custom_call.1} parent=15 // pred_check_branch
          %534 = sbr.rel (%p532) target = $region72
        $region71: #{tpu_custom_call.1} parent=15 // pred_region
          %p535 = scmp.lt.s32.totalorder %s31, 1
          %s536 = scalar_select %p535, %s31, 1
          %s537 = scalar_lea.vmem %s13, %s536
        $region72: #{tpu_custom_call.1} parent=15 // pred_fallthru
          _
      $region16: #{tpu_custom_call.1} parent=5 // pred_fallthru
        _
      %p538 = scmp.le.s32.totalorder 1, %s23
      %p539 = scmp.lt.s32.totalorder %s23, 5
      %p540 = pnand %p538, %p539
      %p541 = pneg %p540
      // Predicated region
      $region73: #{tpu_custom_call.1} parent=5 // pred_check
        _
      $region74: #{tpu_custom_call.1} parent=5 // pred_check_branch
        %543 = sbr.rel (%p540) target = $region76
      $region75: #{tpu_custom_call.1} parent=5 // pred_region
        %s544 = ssub.s32 %s23, 1
        %p545 = scmp.lt.s32.totalorder %s32, 1
        %s546 = scalar_select %p545, %s32, 1
        %s547 = smul.addr %s546, 8
        %s548 = scalar_lea.vmem %s0, %s547
        %p549 = pneg %p61
        %p550 = pneg %p58
        %p551 = scmp.lt.s32.totalorder %s32, 1
        %s552 = scalar_select %p551, %s32, 1
        %s553 = smul.addr %s552, 8
        %s554 = scalar_lea.vmem %s1, %s553
        %p555 = pneg %p87
        %p556 = pneg %p84
        %p557 = scmp.lt.s32.totalorder %s33, 1
        %s558 = scalar_select %p557, %s33, 1
        %s559 = scalar_lea.vmem %s2, %s558
        %p560 = pneg %p113
        %p561 = pneg %p110
        %p562 = scmp.lt.s32.totalorder %s33, 1
        %s563 = scalar_select %p562, %s33, 1
        %s564 = scalar_lea.vmem %s3, %s563
        %p565 = pneg %p139
        %p566 = pneg %p136
        %p567 = scmp.lt.s32.totalorder %s33, 1
        %s568 = scalar_select %p567, %s33, 1
        %s569 = smul.addr %s568, 4
        %s570 = smul.addr %s569, 4
        %s571 = scalar_lea.vmem %s4, %s570
        %p572 = pneg %p165
        %p573 = pneg %p162
        %p574 = scmp.lt.s32.totalorder %s33, 1
        %s575 = scalar_select %p574, %s33, 1
        %s576 = scalar_lea.vmem %s5, %s575
        %p577 = pneg %p191
        %p578 = pneg %p188
        %p579 = scmp.lt.s32.totalorder %s33, 1
        %s580 = scalar_select %p579, %s33, 1
        %s581 = smul.addr %s580, 4
        %s582 = smul.addr %s581, 4
        %s583 = scalar_lea.vmem %s6, %s582
        %p584 = pneg %p217
        %p585 = pneg %p214
        %p586 = scmp.lt.s32.totalorder %s33, 1
        %s587 = scalar_select %p586, %s33, 1
        %s588 = scalar_lea.vmem %s7, %s587
        %p589 = pneg %p243
        %p590 = pneg %p240
        %p591 = scmp.lt.s32.totalorder %s33, 1
        %s592 = scalar_select %p591, %s33, 1
        %s593 = scalar_lea.vmem %s8, %s592
        %p594 = pneg %p269
        %p595 = pneg %p266
        %p596 = scmp.lt.s32.totalorder %s33, 1
        %s597 = scalar_select %p596, %s33, 1
        %s598 = scalar_lea.vmem %s9, %s597
        %p599 = pneg %p295
        %p600 = pneg %p292
        %p601 = scmp.lt.s32.totalorder %s33, 1
        %s602 = scalar_select %p601, %s33, 1
        %s603 = smul.addr %s602, 4
        %s604 = smul.addr %s603, 4
        %s605 = scalar_lea.vmem %s10, %s604
        %p606 = pneg %p321
        %p607 = pneg %p318
        %p608 = scmp.lt.s32.totalorder %s33, 1
        %s609 = scalar_select %p608, %s33, 1
        %s610 = scalar_lea.vmem %s11, %s609
        %p611 = pneg %p347
        %p612 = pneg %p344
        %p613 = scmp.lt.s32.totalorder %s33, 1
        %s614 = scalar_select %p613, %s33, 1
        %s615 = smul.addr %s614, 16
        %s616 = smul.addr %s615, 4
        %s617 = scalar_lea.vmem %s12, %s616
        %p618 = pneg %p373
        %p619 = pneg %p370
        %p620 = scmp.lt.s32.totalorder %s33, 1
        %s621 = scalar_select %p620, %s33, 1
        %s622 = scalar_lea.vmem %s13, %s621
        %p623 = pneg %p399
        %p624 = pneg %p396
        %p625 = pneg %p425
        %p626 = pneg %p422
        %s627 = sand.u32 %s412, 1
        %s628 = scalar_lea.sflag [#allocation4], %s627
        %s629 = sand.u32 %s412, 1
        %s630 = smul.addr %s629, 8
        %s631 = scalar_lea.vmem [#allocation3], %s630
        %p632 = scmp.lt.s32.totalorder %s32, 1
        %s633 = scalar_select %p632, %s32, 1
        %s634 = smul.addr %s633, 8
        %s635 = scalar_lea.vmem %s0, %s634
        %p636 = scmp.lt.s32.totalorder %s32, 1
        %s637 = scalar_select %p636, %s32, 1
        %s638 = smul.addr %s637, 8
        %s639 = scalar_lea.vmem %s1, %s638
        %p640 = scmp.lt.s32.totalorder %s33, 1
        %s641 = scalar_select %p640, %s33, 1
        %s642 = scalar_lea.vmem %s2, %s641
        %p643 = scmp.lt.s32.totalorder %s33, 1
        %s644 = scalar_select %p643, %s33, 1
        %s645 = scalar_lea.vmem %s3, %s644
        %p646 = scmp.lt.s32.totalorder %s33, 1
        %s647 = scalar_select %p646, %s33, 1
        %s648 = smul.addr %s647, 4
        %s649 = smul.addr %s648, 4
        %s650 = scalar_lea.vmem %s4, %s649
        %p651 = scmp.lt.s32.totalorder %s33, 1
        %s652 = scalar_select %p651, %s33, 1
        %s653 = scalar_lea.vmem %s5, %s652
        %p654 = scmp.lt.s32.totalorder %s33, 1
        %s655 = scalar_select %p654, %s33, 1
        %s656 = smul.addr %s655, 4
        %s657 = smul.addr %s656, 4
        %s658 = scalar_lea.vmem %s6, %s657
        %p659 = scmp.lt.s32.totalorder %s33, 1
        %s660 = scalar_select %p659, %s33, 1
        %s661 = scalar_lea.vmem %s7, %s660
        %p662 = scmp.lt.s32.totalorder %s33, 1
        %s663 = scalar_select %p662, %s33, 1
        %s664 = scalar_lea.vmem %s8, %s663
        %p665 = scmp.lt.s32.totalorder %s33, 1
        %s666 = scalar_select %p665, %s33, 1
        %s667 = scalar_lea.vmem %s9, %s666
        %p668 = scmp.lt.s32.totalorder %s33, 1
        %s669 = scalar_select %p668, %s33, 1
        %s670 = smul.addr %s669, 4
        %s671 = smul.addr %s670, 4
        %s672 = scalar_lea.vmem %s10, %s671
        %p673 = scmp.lt.s32.totalorder %s33, 1
        %s674 = scalar_select %p673, %s33, 1
        %s675 = scalar_lea.vmem %s11, %s674
        %p676 = scmp.lt.s32.totalorder %s33, 1
        %s677 = scalar_select %p676, %s33, 1
        %s678 = smul.addr %s677, 16
        %s679 = smul.addr %s678, 4
        %s680 = scalar_lea.vmem %s12, %s679
        %p681 = scmp.lt.s32.totalorder %s33, 1
        %s682 = scalar_select %p681, %s33, 1
        %s683 = scalar_lea.vmem %s13, %s682
        %p685 = scmp.eq.s32.totalorder %s33, 0
        // Predicated region
        $region77: #{tpu_custom_call.1} parent=75 // pred_check
          %p686 = pneg %p685
        $region78: #{tpu_custom_call.1} parent=75 // pred_check_branch
          %688 = sbr.rel (%p686) target = $region80
        $region79: #{tpu_custom_call.1} parent=75 // pred_region
          %v689 = vld [vmem:[%s635] sm:$0xff]
          %vm690 = vcmask 261120
          %691 = vst.msk [vmem:[%s631] sm:$0xff] %vm690, %v689
        $region80: #{tpu_custom_call.1} parent=75 // pred_fallthru
          _
        %v692 = vld [vmem:[%s631] sm:$0xff]
        %v693 = vld [vmem:[%s642] sm:$0x1]
        %v694 = vld [vmem:[%s645] sm:$0x1]
        %vm695 = vcmask 261120
        %v696 = vsel %vm695, %v692, 0.0
        %697 = vadd.xlane.f32.xlu0 %v696
        %v698 = vpop.xlane.xlu0 %697
        %v699 = vrcp.pop 32.0
        %v700 = vmul.f32 32.0, %v699
        %v701 = vsub.f32 1.0, %v700
        %v702 = vmul.f32 %v699, %v701
        %v703 = vadd.f32 %v699, %v702
        %vm704 = vweird.f32 %v699
        %v705 = vsel %vm704, %v699, %v703
        %v706 = vmul.f32 %v698, %v705
        %v707 = vsub.f32 %v692, %v706
        %v708 = vmul.f32 %v707, %v707
        %v709 = vsel %vm695, %v708, 0.0
        %710 = vadd.xlane.f32.xlu0 %v709
        %v711 = vpop.xlane.xlu0 %710
        %v712 = vmul.f32 %v711, %v705
        %v713 = vadd.f32 %v712, 1e-05
        %v714 = vrsqrt.pop %v713
        %v715 = vmul.f32 %v714, %v713
        %v716 = vmul.f32 %v715, %v714
        %v717 = vmul.f32 0.5, %v716
        %v718 = vsub.f32 1.5, %v717
        %v719 = vmul.f32 %v714, %v718
        %vm720 = vweird.f32 %v713
        %vm721 = vweird.f32 %v714
        %vm722 = vmor %vm720, %vm721
        %v723 = vsel %vm722, %v714, %v719
        %v724 = vmul.f32 %v707, %v723
        %v726 = vperm.slane %v693, 0
        %v728 = vmul.f32 %v724, %v726
        %v730 = vperm.slane %v694, 0
        %v732 = vadd.f32 %v728, %v730
        %v733 = vpack.c.bf16 %v732, %v732
        %v734 = vld [vmem:[%s650] sm:$0xf]
        %v735 = vld [vmem:[%s650 + $0x4] sm:$0xf]
        %v736 = vld [vmem:[%s650 + $0x8] sm:$0xf]
        %v737 = vld [vmem:[%s650 + $0xc] sm:$0xf]
        %v738 = vld [vmem:[%s653] sm:$0x1]
        %v740 = vperm.slane %v738, 0
        %v746 = vunpack.c.l.b16 %v734
        %v747 = vunpack.c.l.b16 %v735
        %v748 = vunpack.c.l.b16 %v736
        %v749 = vunpack.c.l.b16 %v737
        %v750 = vpack.c.b16 %v747, %v746
        %v751 = vpack.c.b16 %v749, %v748
        %v755 = vsel %vm695, %v733, 0
        %757 = vmatpush.bf16.msra.mxu0 0
        %758 = vmatpush.bf16.msra.mxu0 0
        %759 = vmatpush.bf16.msra.mxu0 0
        %760 = vmatpush.bf16.msra.mxu0 0
        %761 = vmatpush.bf16.msra.mxu0 0
        %762 = vmatpush.bf16.msra.mxu0 0
        %763 = vmatpush.bf16.msra.mxu0 %v751
        %764 = vmatpush.bf16.msra.mxu0 %v750
        %765 = vmatmul.bf16.gmra.mxu0 %v755
        %v766 = vpop.f32.mrf.mxu0
        %v767 = vadd.f32 %v740, %v766
        %v768 = vpop.f32.mrf.mxu0
        %769 = vdwg.mxu0
        %v770 = vmul.f32 %v767, 0.35355338
        %v771 = vpack.c.bf16 %v770, %v770
        %v772 = vpack.c.bf16 %v767, %v767
        %v773 = vld [vmem:[%s639] sm:$0xff]
        %v775 = vunpack.c.l.b16 %v772
        %v776 = vpack.c.b16 %v775, %v775
        %777 = vrot.lane.b32.xlu0 %v776, 96
        %v778 = vpop.permute.xlu0 %777
        %vm779 = vcmask 64512
        %v781 = vsel %vm779, %v771, 0
        %v784 = vsel %vm779, %v778, 0
        %786 = vmatpush.bf16.xpose.msra.mxu0 0
        %787 = vmatpush.bf16.xpose.msra.mxu0 0
        %788 = vmatpush.bf16.xpose.msra.mxu0 0
        %789 = vmatpush.bf16.xpose.msra.mxu0 0
        %790 = vmatpush.bf16.xpose.msra.mxu0 0
        %791 = vmatpush.bf16.xpose.msra.mxu0 0
        %792 = vmatpush.bf16.xpose.msra.mxu0 0
        %793 = vmatpush.bf16.xpose.msra.mxu0 %v784
        %794 = vmatmul.bf16.gmra.mxu0 %v781
        %v795 = vpop.f32.mrf.mxu0
        %v796 = vadd.f32 %v773, %v795
        %v797 = vpop.f32.mrf.mxu0
        %798 = vdwg.mxu0
        %v799 = vsel %vm779, %v796, -inf
        %800 = vmax.xlane.f32.xlu0 %v799
        %v801 = vpop.xlane.xlu0 %800
        %v802 = vsub.f32 %v796, %v801
        %v803 = vmul.f32 %v802, 1.442695
        %v804 = vpow.pop %v803
        %v805 = vsel %vm779, %v804, 0.0
        %806 = vadd.xlane.f32.xlu0 %v805
        %v807 = vpop.xlane.xlu0 %806
        %v808 = vrcp.pop %v807
        %v809 = vmul.f32 %v804, %v808
        %v810 = vpack.c.bf16 %v809, %v809
        %811 = vrot.lane.b32.xlu0 %v776, 64
        %v812 = vpop.permute.xlu0 %811
        %v814 = vsel %vm779, %v810, 0
        %vm816 = vcmask 1043456
        %v818 = vsel %vm816, %v812, 0
        %820 = vmatpush.bf16.msra.mxu0 0
        %821 = vmatpush.bf16.msra.mxu0 0
        %822 = vmatpush.bf16.msra.mxu0 0
        %823 = vmatpush.bf16.msra.mxu0 0
        %824 = vmatpush.bf16.msra.mxu0 0
        %825 = vmatpush.bf16.msra.mxu0 0
        %826 = vmatpush.bf16.msra.mxu0 0
        %827 = vmatpush.bf16.msra.mxu0 %v818
        %828 = vmatmul.bf16.gmra.mxu0 %v814
        %v829 = vpop.f32.mrf.mxu0
        %v830 = vadd.f32 0.0, %v829
        %v831 = vpop.f32.mrf.mxu0
        %832 = vdwg.mxu0
        %833 = vst.msk [vmem:[#allocation2] sm:$0xff] %vm779, %v830
        %v835 = vunpack.c.l.b16 %v771
        %v836 = vpack.c.b16 %v835, %v835
        %837 = vrot.lane.b32.xlu0 %v836, 120
        %v838 = vpop.permute.xlu0 %837
        %839 = vrot.lane.b32.xlu0 %v776, 88
        %v840 = vpop.permute.xlu0 %839
        %v842 = vsel %vm779, %v838, 0
        %v845 = vsel %vm779, %v840, 0
        %847 = vmatpush.bf16.xpose.msra.mxu0 0
        %848 = vmatpush.bf16.xpose.msra.mxu0 0
        %849 = vmatpush.bf16.xpose.msra.mxu0 0
        %850 = vmatpush.bf16.xpose.msra.mxu0 0
        %851 = vmatpush.bf16.xpose.msra.mxu0 0
        %852 = vmatpush.bf16.xpose.msra.mxu0 0
        %853 = vmatpush.bf16.xpose.msra.mxu0 0
        %854 = vmatpush.bf16.xpose.msra.mxu0 %v845
        %855 = vmatmul.bf16.gmra.mxu0 %v842
        %v856 = vpop.f32.mrf.mxu0
        %v857 = vadd.f32 %v773, %v856
        %v858 = vpop.f32.mrf.mxu0
        %859 = vdwg.mxu0
        %v860 = vsel %vm779, %v857, -inf
        %861 = vmax.xlane.f32.xlu0 %v860
        %v862 = vpop.xlane.xlu0 %861
        %v863 = vsub.f32 %v857, %v862
        %v864 = vmul.f32 %v863, 1.442695
        %v865 = vpow.pop %v864
        %v866 = vsel %vm779, %v865, 0.0
        %867 = vadd.xlane.f32.xlu0 %v866
        %v868 = vpop.xlane.xlu0 %867
        %v869 = vrcp.pop %v868
        %v870 = vmul.f32 %v865, %v869
        %v871 = vpack.c.bf16 %v870, %v870
        %872 = vrot.lane.b32.xlu0 %v776, 56
        %v873 = vpop.permute.xlu0 %872
        %v875 = vsel %vm779, %v871, 0
        %v878 = vsel %vm816, %v873, 0
        %880 = vmatpush.bf16.msra.mxu0 0
        %881 = vmatpush.bf16.msra.mxu0 0
        %882 = vmatpush.bf16.msra.mxu0 0
        %883 = vmatpush.bf16.msra.mxu0 0
        %884 = vmatpush.bf16.msra.mxu0 0
        %885 = vmatpush.bf16.msra.mxu0 0
        %886 = vmatpush.bf16.msra.mxu0 0
        %887 = vmatpush.bf16.msra.mxu0 %v878
        %888 = vmatmul.bf16.gmra.mxu0 %v875
        %v889 = vpop.f32.mrf.mxu0
        %v890 = vadd.f32 0.0, %v889
        %v891 = vpop.f32.mrf.mxu0
        %892 = vdwg.mxu0
        %894 = vrot.lane.b32.xlu0 %v890, 8
        %v895 = vpop.permute.xlu0 %894
        %vm897 = vcmask 130112
        %898 = vst.msk [vmem:[#allocation2] sm:$0xff] %vm897, %v895
        %899 = vrot.lane.b32.xlu0 %v836, 112
        %v900 = vpop.permute.xlu0 %899
        %901 = vrot.lane.b32.xlu0 %v776, 80
        %v902 = vpop.permute.xlu0 %901
        %v904 = vsel %vm779, %v900, 0
        %v907 = vsel %vm779, %v902, 0
        %909 = vmatpush.bf16.xpose.msra.mxu0 0
        %910 = vmatpush.bf16.xpose.msra.mxu0 0
        %911 = vmatpush.bf16.xpose.msra.mxu0 0
        %912 = vmatpush.bf16.xpose.msra.mxu0 0
        %913 = vmatpush.bf16.xpose.msra.mxu0 0
        %914 = vmatpush.bf16.xpose.msra.mxu0 0
        %915 = vmatpush.bf16.xpose.msra.mxu0 0
        %916 = vmatpush.bf16.xpose.msra.mxu0 %v907
        %917 = vmatmul.bf16.gmra.mxu0 %v904
        %v918 = vpop.f32.mrf.mxu0
        %v919 = vadd.f32 %v773, %v918
        %v920 = vpop.f32.mrf.mxu0
        %921 = vdwg.mxu0
        %v922 = vsel %vm779, %v919, -inf
        %923 = vmax.xlane.f32.xlu0 %v922
        %v924 = vpop.xlane.xlu0 %923
        %v925 = vsub.f32 %v919, %v924
        %v926 = vmul.f32 %v925, 1.442695
        %v927 = vpow.pop %v926
        %v928 = vsel %vm779, %v927, 0.0
        %929 = vadd.xlane.f32.xlu0 %v928
        %v930 = vpop.xlane.xlu0 %929
        %v931 = vrcp.pop %v930
        %v932 = vmul.f32 %v927, %v931
        %v933 = vpack.c.bf16 %v932, %v932
        %934 = vrot.lane.b32.xlu0 %v776, 48
        %v935 = vpop.permute.xlu0 %934
        %v937 = vsel %vm779, %v933, 0
        %v940 = vsel %vm816, %v935, 0
        %942 = vmatpush.bf16.msra.mxu0 0
        %943 = vmatpush.bf16.msra.mxu0 0
        %944 = vmatpush.bf16.msra.mxu0 0
        %945 = vmatpush.bf16.msra.mxu0 0
        %946 = vmatpush.bf16.msra.mxu0 0
        %947 = vmatpush.bf16.msra.mxu0 0
        %948 = vmatpush.bf16.msra.mxu0 0
        %949 = vmatpush.bf16.msra.mxu0 %v940
        %950 = vmatmul.bf16.gmra.mxu0 %v937
        %v951 = vpop.f32.mrf.mxu0
        %v952 = vadd.f32 0.0, %v951
        %v953 = vpop.f32.mrf.mxu0
        %954 = vdwg.mxu0
        %956 = vrot.lane.b32.xlu0 %v952, 16
        %v957 = vpop.permute.xlu0 %956
        %vm959 = vcmask 195712
        %960 = vst.msk [vmem:[#allocation2] sm:$0xff] %vm959, %v957
        %961 = vrot.lane.b32.xlu0 %v836, 104
        %v962 = vpop.permute.xlu0 %961
        %963 = vrot.lane.b32.xlu0 %v776, 72
        %v964 = vpop.permute.xlu0 %963
        %v966 = vsel %vm779, %v962, 0
        %v969 = vsel %vm779, %v964, 0
        %971 = vmatpush.bf16.xpose.msra.mxu0 0
        %972 = vmatpush.bf16.xpose.msra.mxu0 0
        %973 = vmatpush.bf16.xpose.msra.mxu0 0
        %974 = vmatpush.bf16.xpose.msra.mxu0 0
        %975 = vmatpush.bf16.xpose.msra.mxu0 0
        %976 = vmatpush.bf16.xpose.msra.mxu0 0
        %977 = vmatpush.bf16.xpose.msra.mxu0 0
        %978 = vmatpush.bf16.xpose.msra.mxu0 %v969
        %979 = vmatmul.bf16.gmra.mxu0 %v966
        %v980 = vpop.f32.mrf.mxu0
        %v981 = vadd.f32 %v773, %v980
        %v982 = vpop.f32.mrf.mxu0
        %983 = vdwg.mxu0
        %v984 = vsel %vm779, %v981, -inf
        %985 = vmax.xlane.f32.xlu0 %v984
        %v986 = vpop.xlane.xlu0 %985
        %v987 = vsub.f32 %v981, %v986
        %v988 = vmul.f32 %v987, 1.442695
        %v989 = vpow.pop %v988
        %v990 = vsel %vm779, %v989, 0.0
        %991 = vadd.xlane.f32.xlu0 %v990
        %v992 = vpop.xlane.xlu0 %991
        %v993 = vrcp.pop %v992
        %v994 = vmul.f32 %v989, %v993
        %v995 = vpack.c.bf16 %v994, %v994
        %996 = vrot.lane.b32.xlu0 %v776, 40
        %v997 = vpop.permute.xlu0 %996
        %v999 = vsel %vm779, %v995, 0
        %v1002 = vsel %vm816, %v997, 0
        %1004 = vmatpush.bf16.msra.mxu0 0
        %1005 = vmatpush.bf16.msra.mxu0 0
        %1006 = vmatpush.bf16.msra.mxu0 0
        %1007 = vmatpush.bf16.msra.mxu0 0
        %1008 = vmatpush.bf16.msra.mxu0 0
        %1009 = vmatpush.bf16.msra.mxu0 0
        %1010 = vmatpush.bf16.msra.mxu0 0
        %1011 = vmatpush.bf16.msra.mxu0 %v1002
        %1012 = vmatmul.bf16.gmra.mxu0 %v999
        %v1013 = vpop.f32.mrf.mxu0
        %v1014 = vadd.f32 0.0, %v1013
        %v1015 = vpop.f32.mrf.mxu0
        %1016 = vdwg.mxu0
        %1018 = vrot.lane.b32.xlu0 %v1014, 24
        %v1019 = vpop.permute.xlu0 %1018
        %vm1021 = vcmask 261312
        %1022 = vst.msk [vmem:[#allocation2] sm:$0xff] %vm1021, %v1019
        %v1023 = vld [vmem:[#allocation2] sm:$0xff]
        %v1024 = vpack.c.bf16 %v1023, %v1023
        %v1025 = vld [vmem:[%s658] sm:$0xf]
        %v1026 = vld [vmem:[%s658 + $0x4] sm:$0xf]
        %v1027 = vld [vmem:[%s658 + $0x8] sm:$0xf]
        %v1028 = vld [vmem:[%s658 + $0xc] sm:$0xf]
        %v1029 = vld [vmem:[%s661] sm:$0x1]
        %v1031 = vperm.slane %v1029, 0
        %v1037 = vunpack.c.l.b16 %v1025
        %v1038 = vunpack.c.l.b16 %v1026
        %v1039 = vunpack.c.l.b16 %v1027
        %v1040 = vunpack.c.l.b16 %v1028
        %v1041 = vpack.c.b16 %v1038, %v1037
        %v1042 = vpack.c.b16 %v1040, %v1039
        %v1046 = vsel %vm695, %v1024, 0
        %1048 = vmatpush.bf16.msra.mxu0 0
        %1049 = vmatpush.bf16.msra.mxu0 0
        %1050 = vmatpush.bf16.msra.mxu0 0
        %1051 = vmatpush.bf16.msra.mxu0 0
        %1052 = vmatpush.bf16.msra.mxu0 0
        %1053 = vmatpush.bf16.msra.mxu0 0
        %1054 = vmatpush.bf16.msra.mxu0 %v1042
        %1055 = vmatpush.bf16.msra.mxu0 %v1041
        %1056 = vmatmul.bf16.gmra.mxu0 %v1046
        %v1057 = vpop.f32.mrf.mxu0
        %v1058 = vadd.f32 %v1031, %v1057
        %v1059 = vpop.f32.mrf.mxu0
        %1060 = vdwg.mxu0
        %v1061 = vadd.f32 %v692, %v1058
        %v1062 = vld [vmem:[%s664] sm:$0x1]
        %v1063 = vld [vmem:[%s667] sm:$0x1]
        %v1064 = vsel %vm695, %v1061, 0.0
        %1065 = vadd.xlane.f32.xlu0 %v1064
        %v1066 = vpop.xlane.xlu0 %1065
        %v1067 = vmul.f32 %v1066, %v705
        %v1068 = vsub.f32 %v1061, %v1067
        %v1069 = vmul.f32 %v1068, %v1068
        %v1070 = vsel %vm695, %v1069, 0.0
        %1071 = vadd.xlane.f32.xlu0 %v1070
        %v1072 = vpop.xlane.xlu0 %1071
        %v1073 = vmul.f32 %v1072, %v705
        %v1074 = vadd.f32 %v1073, 1e-05
        %v1075 = vrsqrt.pop %v1074
        %v1076 = vmul.f32 %v1075, %v1074
        %v1077 = vmul.f32 %v1076, %v1075
        %v1078 = vmul.f32 0.5, %v1077
        %v1079 = vsub.f32 1.5, %v1078
        %v1080 = vmul.f32 %v1075, %v1079
        %vm1081 = vweird.f32 %v1074
        %vm1082 = vweird.f32 %v1075
        %vm1083 = vmor %vm1081, %vm1082
        %v1084 = vsel %vm1083, %v1075, %v1080
        %v1085 = vmul.f32 %v1068, %v1084
        %v1087 = vperm.slane %v1062, 0
        %v1089 = vmul.f32 %v1085, %v1087
        %v1091 = vperm.slane %v1063, 0
        %v1093 = vadd.f32 %v1089, %v1091
        %v1094 = vpack.c.bf16 %v1093, %v1093
        %v1095 = vld [vmem:[%s672] sm:$0xf]
        %v1096 = vld [vmem:[%s672 + $0x4] sm:$0xf]
        %v1097 = vld [vmem:[%s672 + $0x8] sm:$0xf]
        %v1098 = vld [vmem:[%s672 + $0xc] sm:$0xf]
        %v1099 = vld [vmem:[%s675] sm:$0x1]
        %v1101 = vperm.slane %v1099, 0
        %v1107 = vunpack.c.l.b16 %v1095
        %v1108 = vunpack.c.l.b16 %v1096
        %v1109 = vunpack.c.l.b16 %v1097
        %v1110 = vunpack.c.l.b16 %v1098
        %v1111 = vpack.c.b16 %v1108, %v1107
        %v1112 = vpack.c.b16 %v1110, %v1109
        %v1116 = vsel %vm695, %v1094, 0
        %1118 = vmatpush.bf16.msra.mxu0 0
        %1119 = vmatpush.bf16.msra.mxu0 0
        %1120 = vmatpush.bf16.msra.mxu0 0
        %1121 = vmatpush.bf16.msra.mxu0 0
        %1122 = vmatpush.bf16.msra.mxu0 0
        %1123 = vmatpush.bf16.msra.mxu0 0
        %1124 = vmatpush.bf16.msra.mxu0 %v1112
        %1125 = vmatpush.bf16.msra.mxu0 %v1111
        %1126 = vmatmul.bf16.gmra.mxu0 %v1116
        %v1127 = vpop.f32.mrf.mxu0
        %v1128 = vadd.f32 %v1101, %v1127
        %v1129 = vpop.f32.mrf.mxu0
        %1130 = vdwg.mxu0
        %v1131 = vmul.f32 %v1128, 1.702
        %v1132 = vxor.u32 %v1131, 2147483648
        %v1133 = vmul.f32 %v1132, 1.442695
        %v1134 = vpow.pop %v1133
        %v1135 = vadd.f32 %v1134, 1.0
        %v1136 = vrcp.pop %v1135
        %v1137 = vmul.f32 %v1135, %v1136
        %v1138 = vsub.f32 1.0, %v1137
        %v1139 = vmul.f32 %v1136, %v1138
        %v1140 = vadd.f32 %v1136, %v1139
        %vm1141 = vweird.f32 %v1135
        %vm1142 = vweird.f32 %v1136
        %vm1143 = vmor %vm1141, %vm1142
        %v1144 = vsel %vm1143, %v1136, %v1140
        %v1145 = vand.u32 2147483647, %v1135
        %vm1146 = vcmp.eq.f32.partialorder %v1145, 8.507059e+37
        %v1147 = vand.u32 %v1135, 2147483648
        %v1148 = vor.u32 1.1754944e-38, %v1147
        %v1149 = vsel %vm1146, %v1148, %v1144
        %v1150 = vmul.f32 1.0, %v1149
        %v1151 = vmul.f32 %v1128, %v1150
        %v1152 = vpack.c.bf16 %v1151, %v1151
        %v1153 = vld [vmem:[%s680] sm:$0xf]
        %v1154 = vld [vmem:[%s680 + $0x4] sm:$0xf]
        %v1155 = vld [vmem:[%s680 + $0x8] sm:$0xf]
        %v1156 = vld [vmem:[%s680 + $0xc] sm:$0xf]
        %v1157 = vld [vmem:[%s680 + $0x10] sm:$0xf]
        %v1158 = vld [vmem:[%s680 + $0x14] sm:$0xf]
        %v1159 = vld [vmem:[%s680 + $0x18] sm:$0xf]
        %v1160 = vld [vmem:[%s680 + $0x1c] sm:$0xf]
        %v1161 = vld [vmem:[%s680 + $0x20] sm:$0xf]
        %v1162 = vld [vmem:[%s680 + $0x24] sm:$0xf]
        %v1163 = vld [vmem:[%s680 + $0x28] sm:$0xf]
        %v1164 = vld [vmem:[%s680 + $0x2c] sm:$0xf]
        %v1165 = vld [vmem:[%s680 + $0x30] sm:$0xf]
        %v1166 = vld [vmem:[%s680 + $0x34] sm:$0xf]
        %v1167 = vld [vmem:[%s680 + $0x38] sm:$0xf]
        %v1168 = vld [vmem:[%s680 + $0x3c] sm:$0xf]
        %v1169 = vld [vmem:[%s683] sm:$0x1]
        %v1171 = vperm.slane %v1169, 0
        %v1189 = vunpack.c.l.b16 %v1153
        %v1190 = vunpack.c.l.b16 %v1154
        %v1191 = vunpack.c.l.b16 %v1155
        %v1192 = vunpack.c.l.b16 %v1156
        %v1193 = vunpack.c.l.b16 %v1157
        %v1194 = vunpack.c.l.b16 %v1158
        %v1195 = vunpack.c.l.b16 %v1159
        %v1196 = vunpack.c.l.b16 %v1160
        %v1197 = vunpack.c.l.b16 %v1161
        %v1198 = vunpack.c.l.b16 %v1162
        %v1199 = vunpack.c.l.b16 %v1163
        %v1200 = vunpack.c.l.b16 %v1164
        %v1201 = vunpack.c.l.b16 %v1165
        %v1202 = vunpack.c.l.b16 %v1166
        %v1203 = vunpack.c.l.b16 %v1167
        %v1204 = vunpack.c.l.b16 %v1168
        %v1205 = vpack.c.b16 %v1190, %v1189
        %v1206 = vpack.c.b16 %v1192, %v1191
        %v1207 = vpack.c.b16 %v1194, %v1193
        %v1208 = vpack.c.b16 %v1196, %v1195
        %v1209 = vpack.c.b16 %v1198, %v1197
        %v1210 = vpack.c.b16 %v1200, %v1199
        %v1211 = vpack.c.b16 %v1202, %v1201
        %v1212 = vpack.c.b16 %v1204, %v1203
        %1221 = vmatpush.bf16.msra.mxu0 %v1212
        %1222 = vmatpush.bf16.msra.mxu0 %v1211
        %1223 = vmatpush.bf16.msra.mxu0 %v1210
        %1224 = vmatpush.bf16.msra.mxu0 %v1209
        %1225 = vmatpush.bf16.msra.mxu0 %v1208
        %1226 = vmatpush.bf16.msra.mxu0 %v1207
        %1227 = vmatpush.bf16.msra.mxu0 %v1206
        %1228 = vmatpush.bf16.msra.mxu0 %v1205
        %1229 = vmatmul.bf16.gmra.mxu0 %v1152
        %v1230 = vpop.f32.mrf.mxu0
        %v1231 = vadd.f32 %v1171, %v1230
        %v1232 = vpop.f32.mrf.mxu0
        %1233 = vdwg.mxu0
        %v1234 = vadd.f32 %v1061, %v1231
        %1235 = vst.msk [vmem:[%s631] sm:$0xff] %vm695, %v1234
        %s1236 = sand.u32 %s412, 1
        %s1237 = scalar_lea.sflag [#allocation4], %s1236
        %s1238 = sand.u32 %s412, 1
        %s1239 = smul.addr %s1238, 8
        %s1240 = scalar_lea.vmem [#allocation3], %s1239
        // Predicated region
        $region81: #{tpu_custom_call.1} parent=75 // pred_check
          %p1241 = pneg %p422
        $region82: #{tpu_custom_call.1} parent=75 // pred_check_branch
          %1243 = sbr.rel (%p1241) target = $region84
        $region83: #{tpu_custom_call.1} parent=75 // pred_region
          %1245 = vsyncadd %s1237, 0
          %s1246 = smul.addr %s32, 8
          %s1247 = scalar_lea.hbm %s14, %s1246
          %s1249 = sshll.u32 %s1240, 4
          %s1250 = int_to_ptr.vmem [resolvable:$true] %s1249
          %s1251 = sshll.u32 %s1247, 4
          %s1252 = int_to_ptr.hbm [resolvable:$true] %s1251
          %1254 = dma.vmem_to_hbm [thread:$0]  %s1250, 128, %s1252, %s1237
        $region84: #{tpu_custom_call.1} parent=75 // pred_fallthru
          _
      $region76: #{tpu_custom_call.1} parent=5 // pred_fallthru
        _
      %p1255 = scmp.le.s32.totalorder 2, %s23
      // Predicated region
      $region85: #{tpu_custom_call.1} parent=5 // pred_check
        %p1256 = pneg %p1255
      $region86: #{tpu_custom_call.1} parent=5 // pred_check_branch
        %1258 = sbr.rel (%p1256) target = $region88
      $region87: #{tpu_custom_call.1} parent=5 // pred_region
        %s1259 = ssub.s32 %s23, 2
        // Predicated region
        $region89: #{tpu_custom_call.1} parent=87 // pred_check
          %p1260 = pneg %p428
        $region90: #{tpu_custom_call.1} parent=87 // pred_check_branch
          %1262 = sbr.rel (%p1260) target = $region92
        $region91: #{tpu_custom_call.1} parent=87 // pred_region
          %s1263 = sand.u32 %s413, 1
          %s1264 = scalar_lea.sflag [#allocation4], %s1263
          %s1265 = sand.u32 %s413, 1
          %s1266 = smul.addr %s1265, 8
          %s1267 = scalar_lea.vmem [#allocation3], %s1266
          %1269 = dma.done %s1264, 128
        $region92: #{tpu_custom_call.1} parent=87 // pred_fallthru
          _
      $region88: #{tpu_custom_call.1} parent=5 // pred_fallthru
        _
    $region6: #{tpu_custom_call.1} parent=1 // loop_footer
      %s27 = sadd.s32 1, %s23
    $region7: #{tpu_custom_call.1} parent=1 // loop_footer_branch
      %22 = sbr.rel target = $region3
    $region8: #{tpu_custom_call.1} parent=1 // loop_exit
      _
    %1270 = vsyncpa [#allocation4], 1
    %s1271 = scalar_lea.sflag [#allocation4], 1
    %1272 = vsyncpa %s1271, 1

</llo_original>
